<compile_context>
chip_gen: v5e
topology: v5e:2x2
jax: 0.10.0
libtpu: 0.0.40
codegen_flags: <defaults>
</compile_context>

<pallas_src>
import functools

import jax
import jax.numpy as jnp
from jax.experimental import pallas as pl
from jax.experimental.pallas import tpu as pltpu

N_AGENTS = 8
STATE_DIM = 64
HIDDEN_DIM = 32

# Fused-head lane layout.  Every head starts on a 128-lane (vreg) boundary.
W1_OFF = 0
W1_LEN = N_AGENTS * HIDDEN_DIM          # 256
B1_OFF = 256
W2_OFF = 384
B2_OFF = 512
FUSED_DIM = 640                         # 5 x 128 lanes, lane-dense

# The hard-coded layout silently assumes these sizes (review correctness note).
assert W1_LEN == N_AGENTS * HIDDEN_DIM == 256
assert B1_OFF % 128 == 0 and W2_OFF % 128 == 0 and B2_OFF % 128 == 0
assert B1_OFF >= W1_OFF + W1_LEN
assert W2_OFF >= B1_OFF + HIDDEN_DIM
assert B2_OFF >= W2_OFF + HIDDEN_DIM
assert FUSED_DIM >= B2_OFF + 1 and FUSED_DIM % 128 == 0


def mixer_kernel(qs_ref, s_ref, wcat_ref, bcat_ref, out_ref):
    # One MXU matmul computes all four hypernet heads for the whole batch
    # tile: [TB, 64] x [64, 640] -> [TB, 640]; bias row is sublane-broadcast.
    fused = (jnp.dot(s_ref[...], wcat_ref[...],
                     preferred_element_type=jnp.float32)
             + bcat_ref[...])                                       # [TB, 640]

    w1 = jnp.abs(fused[:, W1_OFF:W1_OFF + W1_LEN])                  # [TB, 256]
    b1 = fused[:, B1_OFF:B1_OFF + HIDDEN_DIM]                       # [TB, 32]
    w2 = jnp.abs(fused[:, W2_OFF:W2_OFF + HIDDEN_DIM])              # [TB, 32]
    b2 = fused[:, B2_OFF:B2_OFF + 1]                                # [TB, 1]

    # hidden = relu(agent_qs @ W1 + b1).  W1 is per-row, so the agent
    # contraction is an unrolled 8-step broadcast-multiply-accumulate (VPU);
    # agent_qs arrives as [TB, 8] and is replicated in-kernel (no wrapper-side
    # jnp.repeat any more).
    hidden = b1
    for a in range(N_AGENTS):
        q_a = qs_ref[:, a:a + 1]                                    # [TB, 1]
        hidden = hidden + q_a * w1[:, a * HIDDEN_DIM:(a + 1) * HIDDEN_DIM]
    hidden = jnp.maximum(hidden, 0.0)                               # [TB, 32]

    # q_total = hidden @ W2 + b2   (W2 is logically [TB, 32, 1]).
    out_ref[...] = jnp.sum(hidden * w2, axis=-1, keepdims=True) + b2


def pack_params(params):
    """Fuse the 4 hypernet heads into one lane-dense weight slab + bias row.

    Done once at parameter-setup time, NOT per forward call.
    """
    w1w, w1b, b1w, b1b, w2w, w2b, b2w, b2b = params
    wcat = jnp.zeros((STATE_DIM, FUSED_DIM), jnp.float32)
    bcat = jnp.zeros((1, FUSED_DIM), jnp.float32)
    wcat = wcat.at[:, W1_OFF:W1_OFF + W1_LEN].set(w1w)
    bcat = bcat.at[:, W1_OFF:W1_OFF + W1_LEN].set(w1b)
    wcat = wcat.at[:, B1_OFF:B1_OFF + HIDDEN_DIM].set(b1w)
    bcat = bcat.at[:, B1_OFF:B1_OFF + HIDDEN_DIM].set(b1b)
    wcat = wcat.at[:, W2_OFF:W2_OFF + HIDDEN_DIM].set(w2w)
    bcat = bcat.at[:, W2_OFF:W2_OFF + HIDDEN_DIM].set(w2b)
    wcat = wcat.at[:, B2_OFF:B2_OFF + 1].set(b2w)
    bcat = bcat.at[:, B2_OFF:B2_OFF + 1].set(b2b)
    return wcat, bcat


def _round_up(x, m):
    return (x + m - 1) // m * m


@functools.partial(jax.jit, static_argnames=("tb",))
def mixer_forward(agent_qs, states, wcat, bcat, *, tb=256):
    """agent_qs [B, 8], states [B, 64] -> q_total [B, 1] (per-row QMIX mix)."""
    B = agent_qs.shape[0]
    tb = min(tb, _round_up(B, 8))            # small batches: shrink the tile
    Bp = _round_up(B, tb)
    if Bp != B:                              # ragged last tile: pad (rows are
        agent_qs = jnp.pad(agent_qs, ((0, Bp - B), (0, 0)))   # dropped below)
        states = jnp.pad(states, ((0, Bp - B), (0, 0)))
    agent_qs = agent_qs.astype(jnp.float32)
    states = states.astype(jnp.float32)

    cost = pl.CostEstimate(
        flops=Bp * (2 * STATE_DIM * FUSED_DIM + 3 * W1_LEN + 4 * HIDDEN_DIM),
        transcendentals=0,
        bytes_accessed=4 * (Bp * (N_AGENTS + STATE_DIM + 1)
                            + (STATE_DIM + 1) * FUSED_DIM),
    )

    out = pl.pallas_call(
        mixer_kernel,
        out_shape=jax.ShapeDtypeStruct((Bp, 1), jnp.float32),
        grid_spec=pltpu.PrefetchScalarGridSpec(
            num_scalar_prefetch=0,
            grid=(Bp // tb,),
            in_specs=[
                pl.BlockSpec((tb, N_AGENTS), lambda i: (i, 0)),
                pl.BlockSpec((tb, STATE_DIM), lambda i: (i, 0)),
                # Weight slab + bias row: constant index_map -> DMAed once,
                # VMEM-resident across every grid step.
                pl.BlockSpec((STATE_DIM, FUSED_DIM), lambda i: (0, 0)),
                pl.BlockSpec((1, FUSED_DIM), lambda i: (0, 0)),
            ],
            out_specs=pl.BlockSpec((tb, 1), lambda i: (i, 0)),
        ),
        compiler_params=pltpu.CompilerParams(
            dimension_semantics=("parallel",)),   # v7x: split tiles across TCs
        cost_estimate=cost,
    )(agent_qs, states, wcat, bcat)
    return out[:B]


def linear_params(key, in_dim, out_dim):
    """Deterministic PyTorch-Linear-style init, stored as [in_dim, out_dim]."""
    kw, kb = jax.random.split(key)
    bound = 1.0 / (in_dim ** 0.5)
    w = jax.random.uniform(kw, (in_dim, out_dim), jnp.float32, -bound, bound)
    b = jax.random.uniform(kb, (1, out_dim), jnp.float32, -bound, bound)
    return w, b


def reference(agent_qs, states, params):
    """Pure-JAX replica of Mixer.forward applied independently to each row."""
    w1w, w1b, b1w, b1b, w2w, w2b, b2w, b2b = params
    w1 = jnp.abs(states @ w1w + w1b).reshape(-1, N_AGENTS, HIDDEN_DIM)
    b1 = (states @ b1w + b1b).reshape(-1, 1, HIDDEN_DIM)
    w2 = jnp.abs(states @ w2w + w2b).reshape(-1, HIDDEN_DIM, 1)
    b2 = (states @ b2w + b2b).reshape(-1, 1, 1)
    qs = agent_qs.reshape(-1, 1, N_AGENTS)
    hidden = jax.nn.relu(jnp.einsum('bqa,bah->bqh', qs, w1) + b1)
    q_total = jnp.einsum('bqh,bho->bqo', hidden, w2) + b2
    return q_total.squeeze(-1)                                       # [B, 1]


if __name__ == "__main__":
    key = jax.random.PRNGKey(0)
    k = jax.random.split(key, 6)

    w1w, w1b = linear_params(k[0], STATE_DIM, N_AGENTS * HIDDEN_DIM)
    b1w, b1b = linear_params(k[1], STATE_DIM, HIDDEN_DIM)
    w2w, w2b = linear_params(k[2], STATE_DIM, HIDDEN_DIM)
    b2w, b2b = linear_params(k[3], STATE_DIM, 1)
    params = (w1w, w1b, b1w, b1b, w2w, w2b, b2w, b2b)

    # Fuse heads once (outside the per-call path).
    wcat, bcat = pack_params(params)

    # Batched path: B not a multiple of the tile -> also exercises padding.
    B = 300
    agent_qs = jax.random.normal(k[4], (B, N_AGENTS), jnp.float32)
    states = jax.random.normal(k[5], (B, STATE_DIM), jnp.float32)

    out = jax.block_until_ready(mixer_forward(agent_qs, states, wcat, bcat))
    ref = reference(agent_qs, states, params)
    assert out.shape == (B, 1), out.shape
    # MXU f32 matmul is multi-pass; allow a small tolerance vs the XLA ref.
    assert jnp.allclose(out, ref, rtol=1e-3, atol=1e-3), \
        float(jnp.max(jnp.abs(out - ref)))

    # The module's hard-coded bs=1 interface still works (tile shrinks to 8).
    out1 = jax.block_until_ready(
        mixer_forward(agent_qs[:1], states[:1], wcat, bcat))
    assert out1.shape == (1, 1), out1.shape
    assert jnp.allclose(out1, ref[:1], rtol=1e-3, atol=1e-3), (out1, ref[:1])

    print("KERNEL_OK")
</pallas_src>

<mosaic_0001>
module attributes {stable_mosaic.version = 11 : i64} {
  func.func @mixer_kernel(%arg0: i32, %arg1: memref<256x8xf32, #tpu.memory_space<vmem>>, %arg2: memref<256x64xf32, #tpu.memory_space<vmem>>, %arg3: memref<64x640xf32, #tpu.memory_space<vmem>>, %arg4: memref<1x640xf32, #tpu.memory_space<vmem>>, %arg5: memref<256x1xf32, #tpu.memory_space<vmem>>) attributes {dimension_semantics = [#tpu.dimension_semantics<parallel>], iteration_bounds = array<i64: 2>, scalar_prefetch = 0 : i64, scratch_operands = 0 : i64, tpu.core_type = #tpu.core_type<tc>, window_params = [{transform_indices = @transform_0, window_bounds = array<i64: 256, 8>}, {transform_indices = @transform_1, window_bounds = array<i64: 256, 64>}, {pipeline_mode = #tpu.pipeline_mode<synchronous>, transform_indices = @transform_2, window_bounds = array<i64: 64, 640>}, {pipeline_mode = #tpu.pipeline_mode<synchronous>, transform_indices = @transform_3, window_bounds = array<i64: 1, 640>}, {transform_indices = @transform_4, window_bounds = array<i64: 256, 1>}]} {
    %c0 = arith.constant 0 : index
    %c0_0 = arith.constant 0 : index
    %0 = vector.load %arg2[%c0, %c0_0] : memref<256x64xf32, #tpu.memory_space<vmem>>, vector<256x64xf32>
    %c0_1 = arith.constant 0 : index
    %c0_2 = arith.constant 0 : index
    %1 = vector.load %arg3[%c0_1, %c0_2] : memref<64x640xf32, #tpu.memory_space<vmem>>, vector<64x640xf32>
    %cst = arith.constant dense<0.000000e+00> : vector<256x640xf32>
    %2 = tpu.matmul %0, %1, %cst {dimension_numbers = #tpu.dot_dimension_numbers<[1], [0], [0], [1], [0, 0, 1, 1], [], []>} : vector<256x64xf32>, vector<64x640xf32>, vector<256x640xf32> -> vector<256x640xf32>
    %c0_3 = arith.constant 0 : index
    %c0_4 = arith.constant 0 : index
    %3 = vector.load %arg4[%c0_3, %c0_4] : memref<1x640xf32, #tpu.memory_space<vmem>>, vector<1x640xf32>
    %4 = vector.broadcast %3 : vector<1x640xf32> to vector<256x640xf32>
    %5 = arith.addf %2, %4 : vector<256x640xf32>
    %6 = vector.extract_strided_slice %5 {offsets = [0, 0], sizes = [256, 256], strides = [1, 1]} : vector<256x640xf32> to vector<256x256xf32>
    %7 = math.absf %6 : vector<256x256xf32>
    %8 = vector.extract_strided_slice %5 {offsets = [0, 256], sizes = [256, 32], strides = [1, 1]} : vector<256x640xf32> to vector<256x32xf32>
    %9 = vector.extract_strided_slice %5 {offsets = [0, 384], sizes = [256, 32], strides = [1, 1]} : vector<256x640xf32> to vector<256x32xf32>
    %10 = math.absf %9 : vector<256x32xf32>
    %11 = vector.extract_strided_slice %5 {offsets = [0, 512], sizes = [256, 1], strides = [1, 1]} : vector<256x640xf32> to vector<256x1xf32>
    %c0_5 = arith.constant 0 : index
    %c0_6 = arith.constant 0 : index
    %12 = vector.load %arg1[%c0_5, %c0_6] : memref<256x8xf32, #tpu.memory_space<vmem>>, vector<256x1xf32>
    %13 = vector.extract_strided_slice %7 {offsets = [0, 0], sizes = [256, 32], strides = [1, 1]} : vector<256x256xf32> to vector<256x32xf32>
    %14 = vector.broadcast %12 : vector<256x1xf32> to vector<256x32xf32>
    %15 = arith.mulf %14, %13 : vector<256x32xf32>
    %16 = arith.addf %8, %15 : vector<256x32xf32>
    %c0_7 = arith.constant 0 : index
    %c1 = arith.constant 1 : index
    %17 = vector.load %arg1[%c0_7, %c1] : memref<256x8xf32, #tpu.memory_space<vmem>>, vector<256x1xf32>
    %18 = vector.extract_strided_slice %7 {offsets = [0, 32], sizes = [256, 32], strides = [1, 1]} : vector<256x256xf32> to vector<256x32xf32>
    %19 = vector.broadcast %17 : vector<256x1xf32> to vector<256x32xf32>
    %20 = arith.mulf %19, %18 : vector<256x32xf32>
    %21 = arith.addf %16, %20 : vector<256x32xf32>
    %c0_8 = arith.constant 0 : index
    %c2 = arith.constant 2 : index
    %22 = vector.load %arg1[%c0_8, %c2] : memref<256x8xf32, #tpu.memory_space<vmem>>, vector<256x1xf32>
    %23 = vector.extract_strided_slice %7 {offsets = [0, 64], sizes = [256, 32], strides = [1, 1]} : vector<256x256xf32> to vector<256x32xf32>
    %24 = vector.broadcast %22 : vector<256x1xf32> to vector<256x32xf32>
    %25 = arith.mulf %24, %23 : vector<256x32xf32>
    %26 = arith.addf %21, %25 : vector<256x32xf32>
    %c0_9 = arith.constant 0 : index
    %c3 = arith.constant 3 : index
    %27 = vector.load %arg1[%c0_9, %c3] : memref<256x8xf32, #tpu.memory_space<vmem>>, vector<256x1xf32>
    %28 = vector.extract_strided_slice %7 {offsets = [0, 96], sizes = [256, 32], strides = [1, 1]} : vector<256x256xf32> to vector<256x32xf32>
    %29 = vector.broadcast %27 : vector<256x1xf32> to vector<256x32xf32>
    %30 = arith.mulf %29, %28 : vector<256x32xf32>
    %31 = arith.addf %26, %30 : vector<256x32xf32>
    %c0_10 = arith.constant 0 : index
    %c4 = arith.constant 4 : index
    %32 = vector.load %arg1[%c0_10, %c4] : memref<256x8xf32, #tpu.memory_space<vmem>>, vector<256x1xf32>
    %33 = vector.extract_strided_slice %7 {offsets = [0, 128], sizes = [256, 32], strides = [1, 1]} : vector<256x256xf32> to vector<256x32xf32>
    %34 = vector.broadcast %32 : vector<256x1xf32> to vector<256x32xf32>
    %35 = arith.mulf %34, %33 : vector<256x32xf32>
    %36 = arith.addf %31, %35 : vector<256x32xf32>
    %c0_11 = arith.constant 0 : index
    %c5 = arith.constant 5 : index
    %37 = vector.load %arg1[%c0_11, %c5] : memref<256x8xf32, #tpu.memory_space<vmem>>, vector<256x1xf32>
    %38 = vector.extract_strided_slice %7 {offsets = [0, 160], sizes = [256, 32], strides = [1, 1]} : vector<256x256xf32> to vector<256x32xf32>
    %39 = vector.broadcast %37 : vector<256x1xf32> to vector<256x32xf32>
    %40 = arith.mulf %39, %38 : vector<256x32xf32>
    %41 = arith.addf %36, %40 : vector<256x32xf32>
    %c0_12 = arith.constant 0 : index
    %c6 = arith.constant 6 : index
    %42 = vector.load %arg1[%c0_12, %c6] : memref<256x8xf32, #tpu.memory_space<vmem>>, vector<256x1xf32>
    %43 = vector.extract_strided_slice %7 {offsets = [0, 192], sizes = [256, 32], strides = [1, 1]} : vector<256x256xf32> to vector<256x32xf32>
    %44 = vector.broadcast %42 : vector<256x1xf32> to vector<256x32xf32>
    %45 = arith.mulf %44, %43 : vector<256x32xf32>
    %46 = arith.addf %41, %45 : vector<256x32xf32>
    %c0_13 = arith.constant 0 : index
    %c7 = arith.constant 7 : index
    %47 = vector.load %arg1[%c0_13, %c7] : memref<256x8xf32, #tpu.memory_space<vmem>>, vector<256x1xf32>
    %48 = vector.extract_strided_slice %7 {offsets = [0, 224], sizes = [256, 32], strides = [1, 1]} : vector<256x256xf32> to vector<256x32xf32>
    %49 = vector.broadcast %47 : vector<256x1xf32> to vector<256x32xf32>
    %50 = arith.mulf %49, %48 : vector<256x32xf32>
    %51 = arith.addf %46, %50 : vector<256x32xf32>
    %cst_14 = arith.constant 0.000000e+00 : f32
    %52 = vector.broadcast %cst_14 : f32 to vector<256x32xf32>
    %53 = arith.maximumf %51, %52 : vector<256x32xf32>
    %54 = arith.mulf %53, %10 : vector<256x32xf32>
    %cst_15 = arith.constant dense<0.000000e+00> : vector<256xf32>
    %55 = vector.multi_reduction <add>, %54, %cst_15 [1] : vector<256x32xf32> to vector<256xf32>
    %56 = vector.shape_cast %55 : vector<256xf32> to vector<256x1xf32>
    %57 = arith.addf %56, %11 : vector<256x1xf32>
    %c0_16 = arith.constant 0 : index
    %c0_17 = arith.constant 0 : index
    %58 = vector.load %arg5[%c0_16, %c0_17] : memref<256x1xf32, #tpu.memory_space<vmem>>, vector<256x1xf32>
    tpu.vector_store %arg5[%c0_16, %c0_17], %57 {strides = array<i32>} : memref<256x1xf32, #tpu.memory_space<vmem>>, vector<256x1xf32>,
    return
  }
  func.func @transform_0(%arg0: i32) -> (i32, i32) {
    %c0_i32 = arith.constant 0 : i32
    %c0_i32_0 = arith.constant 0 : i32
    return %arg0, %c0_i32 : i32, i32
  }
  func.func @transform_1(%arg0: i32) -> (i32, i32) {
    %c0_i32 = arith.constant 0 : i32
    %c0_i32_0 = arith.constant 0 : i32
    return %arg0, %c0_i32 : i32, i32
  }
  func.func @transform_2(%arg0: i32) -> (i32, i32) {
    %c0_i32 = arith.constant 0 : i32
    %c0_i32_0 = arith.constant 0 : i32
    %c0_i32_1 = arith.constant 0 : i32
    return %c0_i32, %c0_i32_0 : i32, i32
  }
  func.func @transform_3(%arg0: i32) -> (i32, i32) {
    %c0_i32 = arith.constant 0 : i32
    %c0_i32_0 = arith.constant 0 : i32
    %c0_i32_1 = arith.constant 0 : i32
    return %c0_i32, %c0_i32_0 : i32, i32
  }
  func.func @transform_4(%arg0: i32) -> (i32, i32) {
    %c0_i32 = arith.constant 0 : i32
    %c0_i32_0 = arith.constant 0 : i32
    return %arg0, %c0_i32 : i32, i32
  }
}

</mosaic_0001>

<llo_original>
// kernel: mixer_forward.1
$region0: #{mixer_forward.1}
  #allocation0 [shape = 'u32[]', space=smem, size = 0x4, offset = 0x4, fixed_abs, tag = 'smem constant byte address 0x4 - core index']
  #allocation1 [shape = 'u32[72,128]{1,0:T(1,128)}', space=vmem, size = 0x9000, scoped, tag = 'internal scratch']
  %s0 = inlined_call_operand.vmem [shape: f32[512,8], index: 0, kind: input, shape index: {}]
  %s1 = inlined_call_operand.vmem [shape: f32[512,64], index: 1, kind: input, shape index: {}]
  %s2 = inlined_call_operand.vmem [shape: f32[64,640], index: 2, kind: input, shape index: {}]
  %s3 = inlined_call_operand.vmem [shape: f32[1,640], index: 3, kind: input, shape index: {}]
  %s4 = inlined_call_operand.vmem [shape: f32[512,1], index: 4, kind: output, shape index: {}]
  %s5 = sld [smem:[#allocation0]]
  $region49: #{mixer_forward.1} parent=0
    _
  %s7 = ssub.s32 1, %s5
  %s8 = scalar_select 0, %s7, %s5
  loop: start=0, step=1, limit=4
  $region2: #{mixer_forward.1} parent=0 // loop_pre_header
    _
  $region3: #{mixer_forward.1} parent=0 // loop_header
    %s10 = sphi 0, %s14
    %p11 = scmp.ge.s32.totalorder %s10, 4
    %s20 = sphi 0, %s22
    %s23 = sphi 0, %s20
    %s24 = sphi 0, %s23
    %s40 = sphi 0, %s24
    %s46 = sphi 0, %s48
    %s49 = sphi 0, %s46
    %s50 = sphi 0, %s49
    %s66 = sphi 0, %s50
    %s70 = sphi 0, %s70
    %s72 = sphi 0, %s70
    %s73 = sphi 0, %s72
    %s87 = sphi 0, %s73
    %s91 = sphi 0, %s91
    %s93 = sphi 0, %s91
    %s94 = sphi 0, %s93
    %s108 = sphi 0, %s94
    %s114 = sphi 0, %s116
    %s117 = sphi 0, %s114
    %s118 = sphi 0, %s117
    %s134 = sphi 0, %s118
  $region4: #{mixer_forward.1} parent=0 // loop_header_branch
    %13 = sbr.rel (%p11) target = $region8
  $region5: #{mixer_forward.1} parent=0 // loop_body
    %s15 = ssub.s32 %s10, 1
    %s16 = ssub.s32 %s10, 2
    %s17 = sadd.s32 %s10, 1
    %s18 = ssub.s32 %s10, %s17
    %p19 = scmp.eq.s32.totalorder %s18, 0
    %s21 = sadd.s32 %s20, 1
    %s22 = scalar_select %p19, %s20, %s21
    %p25 = pneg %p19
    %p26 = scmp.eq.s32.totalorder %s10, 1
    %p27 = por %p25, %p26
    %p28 = scmp.ne.s32.totalorder %s20, %s23
    %p29 = scmp.eq.s32.totalorder %s10, 0
    %p30 = por %p28, %p29
    %p31 = scmp.ne.s32.totalorder %s20, %s23
    %p32 = scmp.eq.s32.totalorder %s15, 1
    %p33 = por %p31, %p32
    %p34 = scmp.ne.s32.totalorder %s23, %s24
    %p35 = scmp.eq.s32.totalorder %s15, 0
    %p36 = por %p34, %p35
    %p37 = scmp.ne.s32.totalorder %s23, %s24
    %p38 = scmp.eq.s32.totalorder %s16, 1
    %p39 = por %p37, %p38
    %p41 = scmp.ne.s32.totalorder %s24, %s40
    %p42 = scmp.eq.s32.totalorder %s16, 0
    %p43 = por %p41, %p42
    %s44 = ssub.s32 %s10, %s17
    %p45 = scmp.eq.s32.totalorder %s44, 0
    %s47 = sadd.s32 %s46, 1
    %s48 = scalar_select %p45, %s46, %s47
    %p51 = pneg %p45
    %p52 = scmp.eq.s32.totalorder %s10, 1
    %p53 = por %p51, %p52
    %p54 = scmp.ne.s32.totalorder %s46, %s49
    %p55 = scmp.eq.s32.totalorder %s10, 0
    %p56 = por %p54, %p55
    %p57 = scmp.ne.s32.totalorder %s46, %s49
    %p58 = scmp.eq.s32.totalorder %s15, 1
    %p59 = por %p57, %p58
    %p60 = scmp.ne.s32.totalorder %s49, %s50
    %p61 = scmp.eq.s32.totalorder %s15, 0
    %p62 = por %p60, %p61
    %p63 = scmp.ne.s32.totalorder %s49, %s50
    %p64 = scmp.eq.s32.totalorder %s16, 1
    %p65 = por %p63, %p64
    %p67 = scmp.ne.s32.totalorder %s50, %s66
    %p68 = scmp.eq.s32.totalorder %s16, 0
    %p69 = por %p67, %p68
    %s71 = sadd.s32 %s70, 1
    %p74 = scmp.eq.s32.totalorder %s10, 1
    %p75 = scmp.ne.s32.totalorder %s70, %s72
    %p76 = scmp.eq.s32.totalorder %s10, 0
    %p77 = por %p75, %p76
    %p78 = scmp.ne.s32.totalorder %s70, %s72
    %p79 = scmp.eq.s32.totalorder %s15, 1
    %p80 = por %p78, %p79
    %p81 = scmp.ne.s32.totalorder %s72, %s73
    %p82 = scmp.eq.s32.totalorder %s15, 0
    %p83 = por %p81, %p82
    %p84 = scmp.ne.s32.totalorder %s72, %s73
    %p85 = scmp.eq.s32.totalorder %s16, 1
    %p86 = por %p84, %p85
    %p88 = scmp.ne.s32.totalorder %s73, %s87
    %p89 = scmp.eq.s32.totalorder %s16, 0
    %p90 = por %p88, %p89
    %s92 = sadd.s32 %s91, 1
    %p95 = scmp.eq.s32.totalorder %s10, 1
    %p96 = scmp.ne.s32.totalorder %s91, %s93
    %p97 = scmp.eq.s32.totalorder %s10, 0
    %p98 = por %p96, %p97
    %p99 = scmp.ne.s32.totalorder %s91, %s93
    %p100 = scmp.eq.s32.totalorder %s15, 1
    %p101 = por %p99, %p100
    %p102 = scmp.ne.s32.totalorder %s93, %s94
    %p103 = scmp.eq.s32.totalorder %s15, 0
    %p104 = por %p102, %p103
    %p105 = scmp.ne.s32.totalorder %s93, %s94
    %p106 = scmp.eq.s32.totalorder %s16, 1
    %p107 = por %p105, %p106
    %p109 = scmp.ne.s32.totalorder %s94, %s108
    %p110 = scmp.eq.s32.totalorder %s16, 0
    %p111 = por %p109, %p110
    %s112 = ssub.s32 %s10, %s17
    %p113 = scmp.eq.s32.totalorder %s112, 0
    %s115 = sadd.s32 %s114, 1
    %s116 = scalar_select %p113, %s114, %s115
    %p119 = pneg %p113
    %p120 = scmp.eq.s32.totalorder %s10, 1
    %p121 = por %p119, %p120
    %p122 = scmp.ne.s32.totalorder %s114, %s117
    %p123 = scmp.eq.s32.totalorder %s10, 0
    %p124 = por %p122, %p123
    %p125 = scmp.ne.s32.totalorder %s114, %s117
    %p126 = scmp.eq.s32.totalorder %s15, 1
    %p127 = por %p125, %p126
    %p128 = scmp.ne.s32.totalorder %s117, %s118
    %p129 = scmp.eq.s32.totalorder %s15, 0
    %p130 = por %p128, %p129
    %p131 = scmp.ne.s32.totalorder %s117, %s118
    %p132 = scmp.eq.s32.totalorder %s16, 1
    %p133 = por %p131, %p132
    %p135 = scmp.ne.s32.totalorder %s118, %s134
    %p136 = scmp.eq.s32.totalorder %s16, 0
    %p137 = por %p135, %p136
    %p138 = scmp.le.s32.totalorder 1, %s10
    %p139 = scmp.lt.s32.totalorder %s10, 3
    %p140 = pnand %p138, %p139
    %p141 = pneg %p140
    // Predicated region
    $region9: #{mixer_forward.1} parent=5 // pred_check
      _
    $region10: #{mixer_forward.1} parent=5 // pred_check_branch
      %143 = sbr.rel (%p140) target = $region12
    $region11: #{mixer_forward.1} parent=5 // pred_region
      %s144 = ssub.s32 %s10, 1
      // Predicated region
      $region13: #{mixer_forward.1} parent=11 // pred_check
        %p145 = pneg %p83
      $region14: #{mixer_forward.1} parent=11 // pred_check_branch
        %147 = sbr.rel (%p145) target = $region16
      $region15: #{mixer_forward.1} parent=11 // pred_region
        _
      $region16: #{mixer_forward.1} parent=11 // pred_fallthru
        _
      // Predicated region
      $region17: #{mixer_forward.1} parent=11 // pred_check
        %p148 = pneg %p104
      $region18: #{mixer_forward.1} parent=11 // pred_check_branch
        %150 = sbr.rel (%p148) target = $region20
      $region19: #{mixer_forward.1} parent=11 // pred_region
        _
      $region20: #{mixer_forward.1} parent=11 // pred_fallthru
        _
    $region12: #{mixer_forward.1} parent=5 // pred_fallthru
      _
    %p151 = scmp.lt.s32.totalorder %s10, 2
    // Predicated region
    $region21: #{mixer_forward.1} parent=5 // pred_check
      %p152 = pneg %p151
    $region22: #{mixer_forward.1} parent=5 // pred_check_branch
      %154 = sbr.rel (%p152) target = $region24
    $region23: #{mixer_forward.1} parent=5 // pred_region
      // Predicated region
      $region25: #{mixer_forward.1} parent=23 // pred_check
        %p155 = pneg %p30
      $region26: #{mixer_forward.1} parent=23 // pred_check_branch
        %157 = sbr.rel (%p155) target = $region28
      $region27: #{mixer_forward.1} parent=23 // pred_region
        %s158 = smul.u32 32, %s10
        %p159 = scmp.lt.s32.totalorder %s158, 63
        %s160 = scalar_select %p159, %s158, 63
        %s161 = smul.addr %s160, 8
        %s162 = scalar_lea.vmem %s0, %s161
        %s163 = smul.u32 32, %s10
      $region28: #{mixer_forward.1} parent=23 // pred_fallthru
        _
      // Predicated region
      $region29: #{mixer_forward.1} parent=23 // pred_check
        %p164 = pneg %p56
      $region30: #{mixer_forward.1} parent=23 // pred_check_branch
        %166 = sbr.rel (%p164) target = $region32
      $region31: #{mixer_forward.1} parent=23 // pred_region
        %s167 = smul.u32 32, %s10
        %p168 = scmp.lt.s32.totalorder %s167, 63
        %s169 = scalar_select %p168, %s167, 63
        %s170 = smul.addr %s169, 8
        %s171 = scalar_lea.vmem %s1, %s170
        %s172 = smul.u32 32, %s10
      $region32: #{mixer_forward.1} parent=23 // pred_fallthru
        _
    $region24: #{mixer_forward.1} parent=5 // pred_fallthru
      _
    %p173 = scmp.le.s32.totalorder 1, %s10
    %p174 = scmp.lt.s32.totalorder %s10, 3
    %p175 = pnand %p173, %p174
    %p176 = pneg %p175
    // Predicated region
    $region33: #{mixer_forward.1} parent=5 // pred_check
      _
    $region34: #{mixer_forward.1} parent=5 // pred_check_branch
      %178 = sbr.rel (%p175) target = $region36
    $region35: #{mixer_forward.1} parent=5 // pred_region
      %s179 = ssub.s32 %s10, 1
      %s180 = smul.u32 32, %s15
      %p181 = scmp.lt.s32.totalorder %s180, 63
      %s182 = scalar_select %p181, %s180, 63
      %s183 = smul.addr %s182, 8
      %s184 = scalar_lea.vmem %s0, %s183
      %p185 = pneg %p36
      %p186 = pneg %p33
      %s187 = smul.u32 32, %s15
      %p188 = scmp.lt.s32.totalorder %s187, 63
      %s189 = scalar_select %p188, %s187, 63
      %s190 = smul.addr %s189, 8
      %s191 = scalar_lea.vmem %s1, %s190
      %p192 = pneg %p62
      %p193 = pneg %p59
      %p194 = pneg %p83
      %p195 = pneg %p80
      %p196 = pneg %p104
      %p197 = pneg %p101
      %p198 = pneg %p130
      %p199 = pneg %p127
      %s200 = smul.u32 32, %s15
      %p201 = scmp.lt.s32.totalorder %s200, 63
      %s202 = scalar_select %p201, %s200, 63
      %s203 = smul.addr %s202, 8
      %s204 = scalar_lea.vmem %s4, %s203
      %s205 = smul.u32 32, %s15
      %p206 = scmp.lt.s32.totalorder %s205, 63
      %s207 = scalar_select %p206, %s205, 63
      %s208 = smul.addr %s207, 8
      %s209 = scalar_lea.vmem %s0, %s208
      %s210 = smul.u32 32, %s15
      %s211 = smul.u32 32, %s15
      %p212 = scmp.lt.s32.totalorder %s211, 63
      %s213 = scalar_select %p212, %s211, 63
      %s214 = smul.addr %s213, 8
      %s215 = scalar_lea.vmem %s1, %s214
      %s216 = smul.u32 32, %s15
      %s217 = smul.u32 32, %s15
      %p218 = scmp.lt.s32.totalorder %s217, 63
      %s219 = scalar_select %p218, %s217, 63
      %s220 = smul.addr %s219, 8
      %s221 = scalar_lea.vmem %s4, %s220
      %s222 = smul.u32 32, %s15
      %v223 = vld [vmem:[%s215] sm:$0xff]
      %v224 = vld [vmem:[%s215 + $0x8] sm:$0xff]
      %v225 = vld [vmem:[%s215 + $0x10] sm:$0xff]
      %v226 = vld [vmem:[%s215 + $0x18] sm:$0xff]
      %v227 = vld [vmem:[%s215 + $0x20] sm:$0xff]
      %v228 = vld [vmem:[%s215 + $0x28] sm:$0xff]
      %v229 = vld [vmem:[%s215 + $0x30] sm:$0xff]
      %v230 = vld [vmem:[%s215 + $0x38] sm:$0xff]
      %v231 = vld [vmem:[%s215 + $0x40] sm:$0xff]
      %v232 = vld [vmem:[%s215 + $0x48] sm:$0xff]
      %v233 = vld [vmem:[%s215 + $0x50] sm:$0xff]
      %v234 = vld [vmem:[%s215 + $0x58] sm:$0xff]
      %v235 = vld [vmem:[%s215 + $0x60] sm:$0xff]
      %v236 = vld [vmem:[%s215 + $0x68] sm:$0xff]
      %v237 = vld [vmem:[%s215 + $0x70] sm:$0xff]
      %v238 = vld [vmem:[%s215 + $0x78] sm:$0xff]
      %v239 = vld [vmem:[%s215 + $0x80] sm:$0xff]
      %v240 = vld [vmem:[%s215 + $0x88] sm:$0xff]
      %v241 = vld [vmem:[%s215 + $0x90] sm:$0xff]
      %v242 = vld [vmem:[%s215 + $0x98] sm:$0xff]
      %v243 = vld [vmem:[%s215 + $0xa0] sm:$0xff]
      %v244 = vld [vmem:[%s215 + $0xa8] sm:$0xff]
      %v245 = vld [vmem:[%s215 + $0xb0] sm:$0xff]
      %v246 = vld [vmem:[%s215 + $0xb8] sm:$0xff]
      %v247 = vld [vmem:[%s215 + $0xc0] sm:$0xff]
      %v248 = vld [vmem:[%s215 + $0xc8] sm:$0xff]
      %v249 = vld [vmem:[%s215 + $0xd0] sm:$0xff]
      %v250 = vld [vmem:[%s215 + $0xd8] sm:$0xff]
      %v251 = vld [vmem:[%s215 + $0xe0] sm:$0xff]
      %v252 = vld [vmem:[%s215 + $0xe8] sm:$0xff]
      %v253 = vld [vmem:[%s215 + $0xf0] sm:$0xff]
      %v254 = vld [vmem:[%s215 + $0xf8] sm:$0xff]
      %v255 = vld [vmem:[%s2] sm:$0xff]
      %v256 = vld [vmem:[%s2 + $0x8] sm:$0xff]
      %v257 = vld [vmem:[%s2 + $0x10] sm:$0xff]
      %v258 = vld [vmem:[%s2 + $0x18] sm:$0xff]
      %v259 = vld [vmem:[%s2 + $0x20] sm:$0xff]
      %v260 = vld [vmem:[%s2 + $0x28] sm:$0xff]
      %v261 = vld [vmem:[%s2 + $0x30] sm:$0xff]
      %v262 = vld [vmem:[%s2 + $0x38] sm:$0xff]
      %v263 = vld [vmem:[%s2 + $0x40] sm:$0xff]
      %v264 = vld [vmem:[%s2 + $0x48] sm:$0xff]
      %v265 = vld [vmem:[%s2 + $0x50] sm:$0xff]
      %v266 = vld [vmem:[%s2 + $0x58] sm:$0xff]
      %v267 = vld [vmem:[%s2 + $0x60] sm:$0xff]
      %v268 = vld [vmem:[%s2 + $0x68] sm:$0xff]
      %v269 = vld [vmem:[%s2 + $0x70] sm:$0xff]
      %v270 = vld [vmem:[%s2 + $0x78] sm:$0xff]
      %v271 = vld [vmem:[%s2 + $0x80] sm:$0xff]
      %v272 = vld [vmem:[%s2 + $0x88] sm:$0xff]
      %v273 = vld [vmem:[%s2 + $0x90] sm:$0xff]
      %v274 = vld [vmem:[%s2 + $0x98] sm:$0xff]
      %v275 = vld [vmem:[%s2 + $0xa0] sm:$0xff]
      %v276 = vld [vmem:[%s2 + $0xa8] sm:$0xff]
      %v277 = vld [vmem:[%s2 + $0xb0] sm:$0xff]
      %v278 = vld [vmem:[%s2 + $0xb8] sm:$0xff]
      %v279 = vld [vmem:[%s2 + $0xc0] sm:$0xff]
      %v280 = vld [vmem:[%s2 + $0xc8] sm:$0xff]
      %v281 = vld [vmem:[%s2 + $0xd0] sm:$0xff]
      %v282 = vld [vmem:[%s2 + $0xd8] sm:$0xff]
      %v283 = vld [vmem:[%s2 + $0xe0] sm:$0xff]
      %v284 = vld [vmem:[%s2 + $0xe8] sm:$0xff]
      %v285 = vld [vmem:[%s2 + $0xf0] sm:$0xff]
      %v286 = vld [vmem:[%s2 + $0xf8] sm:$0xff]
      %v287 = vld [vmem:[%s2 + $0x100] sm:$0xff]
      %v288 = vld [vmem:[%s2 + $0x108] sm:$0xff]
      %v289 = vld [vmem:[%s2 + $0x110] sm:$0xff]
      %v290 = vld [vmem:[%s2 + $0x118] sm:$0xff]
      %v291 = vld [vmem:[%s2 + $0x120] sm:$0xff]
      %v292 = vld [vmem:[%s2 + $0x128] sm:$0xff]
      %v293 = vld [vmem:[%s2 + $0x130] sm:$0xff]
      %v294 = vld [vmem:[%s2 + $0x138] sm:$0xff]
      %v295 = vld [vmem:[%s3] sm:$0x1f]
      %v297 = vperm.slane %v295, 0
      %v298 = vperm.slane %v295, 1
      %v299 = vperm.slane %v295, 2
      %v300 = vperm.slane %v295, 3
      %v301 = vperm.slane %v295, 4
      %vm307 = vcmask 523264
      %v309 = vsel %vm307, %v223, 0
      %v312 = vsel %vm307, %v224, 0
      %v315 = vsel %vm307, %v225, 0
      %v318 = vsel %vm307, %v226, 0
      %v321 = vsel %vm307, %v227, 0
      %v324 = vsel %vm307, %v228, 0
      %v327 = vsel %vm307, %v229, 0
      %v330 = vsel %vm307, %v230, 0
      %v333 = vsel %vm307, %v231, 0
      %v336 = vsel %vm307, %v232, 0
      %v339 = vsel %vm307, %v233, 0
      %v342 = vsel %vm307, %v234, 0
      %v345 = vsel %vm307, %v235, 0
      %v348 = vsel %vm307, %v236, 0
      %v351 = vsel %vm307, %v237, 0
      %v354 = vsel %vm307, %v238, 0
      %v357 = vsel %vm307, %v239, 0
      %v360 = vsel %vm307, %v240, 0
      %v363 = vsel %vm307, %v241, 0
      %v366 = vsel %vm307, %v242, 0
      %v369 = vsel %vm307, %v243, 0
      %v372 = vsel %vm307, %v244, 0
      %v375 = vsel %vm307, %v245, 0
      %v378 = vsel %vm307, %v246, 0
      %v381 = vsel %vm307, %v247, 0
      %v384 = vsel %vm307, %v248, 0
      %v387 = vsel %vm307, %v249, 0
      %v390 = vsel %vm307, %v250, 0
      %v393 = vsel %vm307, %v251, 0
      %v396 = vsel %vm307, %v252, 0
      %v399 = vsel %vm307, %v253, 0
      %v402 = vsel %vm307, %v254, 0
      %404 = vmatpush.msra.mxu0 0.0
      %405 = vmatpush.msra.mxu0 0.0
      %406 = vmatpush.msra.mxu0 0.0
      %407 = vmatpush.msra.mxu0 0.0
      %408 = vmatpush.msra.mxu0 0.0
      %409 = vmatpush.msra.mxu0 0.0
      %410 = vmatpush.msra.mxu0 0.0
      %411 = vmatpush.msra.mxu0 0.0
      %412 = vmatpush.msra.mxu0 %v290
      %413 = vmatpush.msra.mxu0 %v285
      %414 = vmatpush.msra.mxu0 %v280
      %415 = vmatpush.msra.mxu0 %v275
      %416 = vmatpush.msra.mxu0 %v270
      %417 = vmatpush.msra.mxu0 %v265
      %418 = vmatpush.msra.mxu0 %v260
      %419 = vmatpush.msra.mxu0 %v255
      %420 = vmatmul.f32.gmra.mxu0 %v309
      %v421 = vpop.f32.mrf.mxu0
      %v422 = vadd.f32 %v297, %v421
      %423 = vmatmul.f32.gmra.mxu0 %v312
      %v424 = vpop.f32.mrf.mxu0
      %v425 = vadd.f32 %v297, %v424
      %426 = vmatmul.f32.gmra.mxu0 %v315
      %v427 = vpop.f32.mrf.mxu0
      %v428 = vadd.f32 %v297, %v427
      %429 = vmatmul.f32.gmra.mxu0 %v318
      %v430 = vpop.f32.mrf.mxu0
      %v431 = vadd.f32 %v297, %v430
      %432 = vmatmul.f32.gmra.mxu0 %v321
      %v433 = vpop.f32.mrf.mxu0
      %v434 = vadd.f32 %v297, %v433
      %435 = vmatmul.f32.gmra.mxu0 %v324
      %v436 = vpop.f32.mrf.mxu0
      %v437 = vadd.f32 %v297, %v436
      %438 = vmatmul.f32.gmra.mxu0 %v327
      %v439 = vpop.f32.mrf.mxu0
      %v440 = vadd.f32 %v297, %v439
      %441 = vmatmul.f32.gmra.mxu0 %v330
      %v442 = vpop.f32.mrf.mxu0
      %v443 = vadd.f32 %v297, %v442
      %444 = vmatmul.f32.gmra.mxu0 %v333
      %v445 = vpop.f32.mrf.mxu0
      %v446 = vadd.f32 %v297, %v445
      %447 = vmatmul.f32.gmra.mxu0 %v336
      %v448 = vpop.f32.mrf.mxu0
      %v449 = vadd.f32 %v297, %v448
      %450 = vmatmul.f32.gmra.mxu0 %v339
      %v451 = vpop.f32.mrf.mxu0
      %v452 = vadd.f32 %v297, %v451
      %453 = vmatmul.f32.gmra.mxu0 %v342
      %v454 = vpop.f32.mrf.mxu0
      %v455 = vadd.f32 %v297, %v454
      %456 = vmatmul.f32.gmra.mxu0 %v345
      %v457 = vpop.f32.mrf.mxu0
      %v458 = vadd.f32 %v297, %v457
      %459 = vmatmul.f32.gmra.mxu0 %v348
      %v460 = vpop.f32.mrf.mxu0
      %v461 = vadd.f32 %v297, %v460
      %462 = vmatmul.f32.gmra.mxu0 %v351
      %v463 = vpop.f32.mrf.mxu0
      %v464 = vadd.f32 %v297, %v463
      %465 = vmatmul.f32.gmra.mxu0 %v354
      %v466 = vpop.f32.mrf.mxu0
      %v467 = vadd.f32 %v297, %v466
      %468 = vmatmul.f32.gmra.mxu0 %v357
      %v469 = vpop.f32.mrf.mxu0
      %v470 = vadd.f32 %v297, %v469
      %471 = vmatmul.f32.gmra.mxu0 %v360
      %v472 = vpop.f32.mrf.mxu0
      %v473 = vadd.f32 %v297, %v472
      %474 = vmatmul.f32.gmra.mxu0 %v363
      %v475 = vpop.f32.mrf.mxu0
      %v476 = vadd.f32 %v297, %v475
      %477 = vmatmul.f32.gmra.mxu0 %v366
      %v478 = vpop.f32.mrf.mxu0
      %v479 = vadd.f32 %v297, %v478
      %480 = vmatmul.f32.gmra.mxu0 %v369
      %v481 = vpop.f32.mrf.mxu0
      %v482 = vadd.f32 %v297, %v481
      %483 = vmatmul.f32.gmra.mxu0 %v372
      %v484 = vpop.f32.mrf.mxu0
      %v485 = vadd.f32 %v297, %v484
      %486 = vmatmul.f32.gmra.mxu0 %v375
      %v487 = vpop.f32.mrf.mxu0
      %v488 = vadd.f32 %v297, %v487
      %489 = vmatmul.f32.gmra.mxu0 %v378
      %v490 = vpop.f32.mrf.mxu0
      %v491 = vadd.f32 %v297, %v490
      %492 = vmatmul.f32.gmra.mxu0 %v381
      %v493 = vpop.f32.mrf.mxu0
      %v494 = vadd.f32 %v297, %v493
      %495 = vmatmul.f32.gmra.mxu0 %v384
      %v496 = vpop.f32.mrf.mxu0
      %v497 = vadd.f32 %v297, %v496
      %498 = vmatmul.f32.gmra.mxu0 %v387
      %v499 = vpop.f32.mrf.mxu0
      %v500 = vadd.f32 %v297, %v499
      %501 = vmatmul.f32.gmra.mxu0 %v390
      %v502 = vpop.f32.mrf.mxu0
      %v503 = vadd.f32 %v297, %v502
      %504 = vmatmul.f32.gmra.mxu0 %v393
      %v505 = vpop.f32.mrf.mxu0
      %v506 = vadd.f32 %v297, %v505
      %507 = vmatmul.f32.gmra.mxu0 %v396
      %v508 = vpop.f32.mrf.mxu0
      %v509 = vadd.f32 %v297, %v508
      %510 = vmatmul.f32.gmra.mxu0 %v399
      %v511 = vpop.f32.mrf.mxu0
      %v512 = vadd.f32 %v297, %v511
      %513 = vmatmul.f32.gmra.mxu0 %v402
      %v514 = vpop.f32.mrf.mxu0
      %v515 = vadd.f32 %v297, %v514
      %516 = vdwg.mxu0
      %517 = vmatpush.msra.mxu0 0.0
      %518 = vmatpush.msra.mxu0 0.0
      %519 = vmatpush.msra.mxu0 0.0
      %520 = vmatpush.msra.mxu0 0.0
      %521 = vmatpush.msra.mxu0 0.0
      %522 = vmatpush.msra.mxu0 0.0
      %523 = vmatpush.msra.mxu0 0.0
      %524 = vmatpush.msra.mxu0 0.0
      %525 = vmatpush.msra.mxu0 %v291
      %526 = vmatpush.msra.mxu0 %v286
      %527 = vmatpush.msra.mxu0 %v281
      %528 = vmatpush.msra.mxu0 %v276
      %529 = vmatpush.msra.mxu0 %v271
      %530 = vmatpush.msra.mxu0 %v266
      %531 = vmatpush.msra.mxu0 %v261
      %532 = vmatpush.msra.mxu0 %v256
      %533 = vmatmul.f32.gmra.mxu0 %v309
      %v534 = vpop.f32.mrf.mxu0
      %v535 = vadd.f32 %v298, %v534
      %536 = vmatmul.f32.gmra.mxu0 %v312
      %v537 = vpop.f32.mrf.mxu0
      %v538 = vadd.f32 %v298, %v537
      %539 = vmatmul.f32.gmra.mxu0 %v315
      %v540 = vpop.f32.mrf.mxu0
      %v541 = vadd.f32 %v298, %v540
      %542 = vmatmul.f32.gmra.mxu0 %v318
      %v543 = vpop.f32.mrf.mxu0
      %v544 = vadd.f32 %v298, %v543
      %545 = vmatmul.f32.gmra.mxu0 %v321
      %v546 = vpop.f32.mrf.mxu0
      %v547 = vadd.f32 %v298, %v546
      %548 = vmatmul.f32.gmra.mxu0 %v324
      %v549 = vpop.f32.mrf.mxu0
      %v550 = vadd.f32 %v298, %v549
      %551 = vmatmul.f32.gmra.mxu0 %v327
      %v552 = vpop.f32.mrf.mxu0
      %v553 = vadd.f32 %v298, %v552
      %554 = vmatmul.f32.gmra.mxu0 %v330
      %v555 = vpop.f32.mrf.mxu0
      %v556 = vadd.f32 %v298, %v555
      %557 = vmatmul.f32.gmra.mxu0 %v333
      %v558 = vpop.f32.mrf.mxu0
      %v559 = vadd.f32 %v298, %v558
      %560 = vmatmul.f32.gmra.mxu0 %v336
      %v561 = vpop.f32.mrf.mxu0
      %v562 = vadd.f32 %v298, %v561
      %563 = vmatmul.f32.gmra.mxu0 %v339
      %v564 = vpop.f32.mrf.mxu0
      %v565 = vadd.f32 %v298, %v564
      %566 = vmatmul.f32.gmra.mxu0 %v342
      %v567 = vpop.f32.mrf.mxu0
      %v568 = vadd.f32 %v298, %v567
      %569 = vmatmul.f32.gmra.mxu0 %v345
      %v570 = vpop.f32.mrf.mxu0
      %v571 = vadd.f32 %v298, %v570
      %572 = vmatmul.f32.gmra.mxu0 %v348
      %v573 = vpop.f32.mrf.mxu0
      %v574 = vadd.f32 %v298, %v573
      %575 = vmatmul.f32.gmra.mxu0 %v351
      %v576 = vpop.f32.mrf.mxu0
      %v577 = vadd.f32 %v298, %v576
      %578 = vmatmul.f32.gmra.mxu0 %v354
      %v579 = vpop.f32.mrf.mxu0
      %v580 = vadd.f32 %v298, %v579
      %581 = vmatmul.f32.gmra.mxu0 %v357
      %v582 = vpop.f32.mrf.mxu0
      %v583 = vadd.f32 %v298, %v582
      %584 = vmatmul.f32.gmra.mxu0 %v360
      %v585 = vpop.f32.mrf.mxu0
      %v586 = vadd.f32 %v298, %v585
      %587 = vmatmul.f32.gmra.mxu0 %v363
      %v588 = vpop.f32.mrf.mxu0
      %v589 = vadd.f32 %v298, %v588
      %590 = vmatmul.f32.gmra.mxu0 %v366
      %v591 = vpop.f32.mrf.mxu0
      %v592 = vadd.f32 %v298, %v591
      %593 = vmatmul.f32.gmra.mxu0 %v369
      %v594 = vpop.f32.mrf.mxu0
      %v595 = vadd.f32 %v298, %v594
      %596 = vmatmul.f32.gmra.mxu0 %v372
      %v597 = vpop.f32.mrf.mxu0
      %v598 = vadd.f32 %v298, %v597
      %599 = vmatmul.f32.gmra.mxu0 %v375
      %v600 = vpop.f32.mrf.mxu0
      %v601 = vadd.f32 %v298, %v600
      %602 = vmatmul.f32.gmra.mxu0 %v378
      %v603 = vpop.f32.mrf.mxu0
      %v604 = vadd.f32 %v298, %v603
      %605 = vmatmul.f32.gmra.mxu0 %v381
      %v606 = vpop.f32.mrf.mxu0
      %v607 = vadd.f32 %v298, %v606
      %608 = vmatmul.f32.gmra.mxu0 %v384
      %v609 = vpop.f32.mrf.mxu0
      %v610 = vadd.f32 %v298, %v609
      %611 = vmatmul.f32.gmra.mxu0 %v387
      %v612 = vpop.f32.mrf.mxu0
      %v613 = vadd.f32 %v298, %v612
      %614 = vmatmul.f32.gmra.mxu0 %v390
      %v615 = vpop.f32.mrf.mxu0
      %v616 = vadd.f32 %v298, %v615
      %617 = vmatmul.f32.gmra.mxu0 %v393
      %v618 = vpop.f32.mrf.mxu0
      %v619 = vadd.f32 %v298, %v618
      %620 = vmatmul.f32.gmra.mxu0 %v396
      %v621 = vpop.f32.mrf.mxu0
      %v622 = vadd.f32 %v298, %v621
      %623 = vmatmul.f32.gmra.mxu0 %v399
      %v624 = vpop.f32.mrf.mxu0
      %v625 = vadd.f32 %v298, %v624
      %626 = vmatmul.f32.gmra.mxu0 %v402
      %v627 = vpop.f32.mrf.mxu0
      %v628 = vadd.f32 %v298, %v627
      %629 = vdwg.mxu0
      %630 = vmatpush.msra.mxu0 0.0
      %631 = vmatpush.msra.mxu0 0.0
      %632 = vmatpush.msra.mxu0 0.0
      %633 = vmatpush.msra.mxu0 0.0
      %634 = vmatpush.msra.mxu0 0.0
      %635 = vmatpush.msra.mxu0 0.0
      %636 = vmatpush.msra.mxu0 0.0
      %637 = vmatpush.msra.mxu0 0.0
      %638 = vmatpush.msra.mxu0 %v292
      %639 = vmatpush.msra.mxu0 %v287
      %640 = vmatpush.msra.mxu0 %v282
      %641 = vmatpush.msra.mxu0 %v277
      %642 = vmatpush.msra.mxu0 %v272
      %643 = vmatpush.msra.mxu0 %v267
      %644 = vmatpush.msra.mxu0 %v262
      %645 = vmatpush.msra.mxu0 %v257
      %646 = vmatmul.f32.gmra.mxu0 %v309
      %v647 = vpop.f32.mrf.mxu0
      %v648 = vadd.f32 %v299, %v647
      %649 = vmatmul.f32.gmra.mxu0 %v312
      %v650 = vpop.f32.mrf.mxu0
      %v651 = vadd.f32 %v299, %v650
      %652 = vmatmul.f32.gmra.mxu0 %v315
      %v653 = vpop.f32.mrf.mxu0
      %v654 = vadd.f32 %v299, %v653
      %655 = vmatmul.f32.gmra.mxu0 %v318
      %v656 = vpop.f32.mrf.mxu0
      %v657 = vadd.f32 %v299, %v656
      %658 = vmatmul.f32.gmra.mxu0 %v321
      %v659 = vpop.f32.mrf.mxu0
      %v660 = vadd.f32 %v299, %v659
      %661 = vmatmul.f32.gmra.mxu0 %v324
      %v662 = vpop.f32.mrf.mxu0
      %v663 = vadd.f32 %v299, %v662
      %664 = vmatmul.f32.gmra.mxu0 %v327
      %v665 = vpop.f32.mrf.mxu0
      %v666 = vadd.f32 %v299, %v665
      %667 = vmatmul.f32.gmra.mxu0 %v330
      %v668 = vpop.f32.mrf.mxu0
      %v669 = vadd.f32 %v299, %v668
      %670 = vmatmul.f32.gmra.mxu0 %v333
      %v671 = vpop.f32.mrf.mxu0
      %v672 = vadd.f32 %v299, %v671
      %673 = vmatmul.f32.gmra.mxu0 %v336
      %v674 = vpop.f32.mrf.mxu0
      %v675 = vadd.f32 %v299, %v674
      %676 = vmatmul.f32.gmra.mxu0 %v339
      %v677 = vpop.f32.mrf.mxu0
      %v678 = vadd.f32 %v299, %v677
      %679 = vmatmul.f32.gmra.mxu0 %v342
      %v680 = vpop.f32.mrf.mxu0
      %v681 = vadd.f32 %v299, %v680
      %682 = vmatmul.f32.gmra.mxu0 %v345
      %v683 = vpop.f32.mrf.mxu0
      %v684 = vadd.f32 %v299, %v683
      %685 = vmatmul.f32.gmra.mxu0 %v348
      %v686 = vpop.f32.mrf.mxu0
      %v687 = vadd.f32 %v299, %v686
      %688 = vmatmul.f32.gmra.mxu0 %v351
      %v689 = vpop.f32.mrf.mxu0
      %v690 = vadd.f32 %v299, %v689
      %691 = vmatmul.f32.gmra.mxu0 %v354
      %v692 = vpop.f32.mrf.mxu0
      %v693 = vadd.f32 %v299, %v692
      %694 = vmatmul.f32.gmra.mxu0 %v357
      %v695 = vpop.f32.mrf.mxu0
      %v696 = vadd.f32 %v299, %v695
      %697 = vmatmul.f32.gmra.mxu0 %v360
      %v698 = vpop.f32.mrf.mxu0
      %v699 = vadd.f32 %v299, %v698
      %700 = vmatmul.f32.gmra.mxu0 %v363
      %v701 = vpop.f32.mrf.mxu0
      %v702 = vadd.f32 %v299, %v701
      %703 = vmatmul.f32.gmra.mxu0 %v366
      %v704 = vpop.f32.mrf.mxu0
      %v705 = vadd.f32 %v299, %v704
      %706 = vmatmul.f32.gmra.mxu0 %v369
      %v707 = vpop.f32.mrf.mxu0
      %v708 = vadd.f32 %v299, %v707
      %709 = vmatmul.f32.gmra.mxu0 %v372
      %v710 = vpop.f32.mrf.mxu0
      %v711 = vadd.f32 %v299, %v710
      %712 = vmatmul.f32.gmra.mxu0 %v375
      %v713 = vpop.f32.mrf.mxu0
      %v714 = vadd.f32 %v299, %v713
      %715 = vmatmul.f32.gmra.mxu0 %v378
      %v716 = vpop.f32.mrf.mxu0
      %v717 = vadd.f32 %v299, %v716
      %718 = vmatmul.f32.gmra.mxu0 %v381
      %v719 = vpop.f32.mrf.mxu0
      %v720 = vadd.f32 %v299, %v719
      %721 = vmatmul.f32.gmra.mxu0 %v384
      %v722 = vpop.f32.mrf.mxu0
      %v723 = vadd.f32 %v299, %v722
      %724 = vmatmul.f32.gmra.mxu0 %v387
      %v725 = vpop.f32.mrf.mxu0
      %v726 = vadd.f32 %v299, %v725
      %727 = vmatmul.f32.gmra.mxu0 %v390
      %v728 = vpop.f32.mrf.mxu0
      %v729 = vadd.f32 %v299, %v728
      %730 = vmatmul.f32.gmra.mxu0 %v393
      %v731 = vpop.f32.mrf.mxu0
      %v732 = vadd.f32 %v299, %v731
      %733 = vmatmul.f32.gmra.mxu0 %v396
      %v734 = vpop.f32.mrf.mxu0
      %v735 = vadd.f32 %v299, %v734
      %736 = vmatmul.f32.gmra.mxu0 %v399
      %v737 = vpop.f32.mrf.mxu0
      %v738 = vadd.f32 %v299, %v737
      %739 = vmatmul.f32.gmra.mxu0 %v402
      %v740 = vpop.f32.mrf.mxu0
      %v741 = vadd.f32 %v299, %v740
      %742 = vdwg.mxu0
      %743 = vmatpush.msra.mxu0 0.0
      %744 = vmatpush.msra.mxu0 0.0
      %745 = vmatpush.msra.mxu0 0.0
      %746 = vmatpush.msra.mxu0 0.0
      %747 = vmatpush.msra.mxu0 0.0
      %748 = vmatpush.msra.mxu0 0.0
      %749 = vmatpush.msra.mxu0 0.0
      %750 = vmatpush.msra.mxu0 0.0
      %751 = vmatpush.msra.mxu0 %v293
      %752 = vmatpush.msra.mxu0 %v288
      %753 = vmatpush.msra.mxu0 %v283
      %754 = vmatpush.msra.mxu0 %v278
      %755 = vmatpush.msra.mxu0 %v273
      %756 = vmatpush.msra.mxu0 %v268
      %757 = vmatpush.msra.mxu0 %v263
      %758 = vmatpush.msra.mxu0 %v258
      %759 = vmatmul.f32.gmra.mxu0 %v309
      %v760 = vpop.f32.mrf.mxu0
      %v761 = vadd.f32 %v300, %v760
      %762 = vmatmul.f32.gmra.mxu0 %v312
      %v763 = vpop.f32.mrf.mxu0
      %v764 = vadd.f32 %v300, %v763
      %765 = vmatmul.f32.gmra.mxu0 %v315
      %v766 = vpop.f32.mrf.mxu0
      %v767 = vadd.f32 %v300, %v766
      %768 = vmatmul.f32.gmra.mxu0 %v318
      %v769 = vpop.f32.mrf.mxu0
      %v770 = vadd.f32 %v300, %v769
      %771 = vmatmul.f32.gmra.mxu0 %v321
      %v772 = vpop.f32.mrf.mxu0
      %v773 = vadd.f32 %v300, %v772
      %774 = vmatmul.f32.gmra.mxu0 %v324
      %v775 = vpop.f32.mrf.mxu0
      %v776 = vadd.f32 %v300, %v775
      %777 = vmatmul.f32.gmra.mxu0 %v327
      %v778 = vpop.f32.mrf.mxu0
      %v779 = vadd.f32 %v300, %v778
      %780 = vmatmul.f32.gmra.mxu0 %v330
      %v781 = vpop.f32.mrf.mxu0
      %v782 = vadd.f32 %v300, %v781
      %783 = vmatmul.f32.gmra.mxu0 %v333
      %v784 = vpop.f32.mrf.mxu0
      %v785 = vadd.f32 %v300, %v784
      %786 = vmatmul.f32.gmra.mxu0 %v336
      %v787 = vpop.f32.mrf.mxu0
      %v788 = vadd.f32 %v300, %v787
      %789 = vmatmul.f32.gmra.mxu0 %v339
      %v790 = vpop.f32.mrf.mxu0
      %v791 = vadd.f32 %v300, %v790
      %792 = vmatmul.f32.gmra.mxu0 %v342
      %v793 = vpop.f32.mrf.mxu0
      %v794 = vadd.f32 %v300, %v793
      %795 = vmatmul.f32.gmra.mxu0 %v345
      %v796 = vpop.f32.mrf.mxu0
      %v797 = vadd.f32 %v300, %v796
      %798 = vmatmul.f32.gmra.mxu0 %v348
      %v799 = vpop.f32.mrf.mxu0
      %v800 = vadd.f32 %v300, %v799
      %801 = vmatmul.f32.gmra.mxu0 %v351
      %v802 = vpop.f32.mrf.mxu0
      %v803 = vadd.f32 %v300, %v802
      %804 = vmatmul.f32.gmra.mxu0 %v354
      %v805 = vpop.f32.mrf.mxu0
      %v806 = vadd.f32 %v300, %v805
      %807 = vmatmul.f32.gmra.mxu0 %v357
      %v808 = vpop.f32.mrf.mxu0
      %v809 = vadd.f32 %v300, %v808
      %810 = vmatmul.f32.gmra.mxu0 %v360
      %v811 = vpop.f32.mrf.mxu0
      %v812 = vadd.f32 %v300, %v811
      %813 = vmatmul.f32.gmra.mxu0 %v363
      %v814 = vpop.f32.mrf.mxu0
      %v815 = vadd.f32 %v300, %v814
      %816 = vmatmul.f32.gmra.mxu0 %v366
      %v817 = vpop.f32.mrf.mxu0
      %v818 = vadd.f32 %v300, %v817
      %819 = vmatmul.f32.gmra.mxu0 %v369
      %v820 = vpop.f32.mrf.mxu0
      %v821 = vadd.f32 %v300, %v820
      %822 = vmatmul.f32.gmra.mxu0 %v372
      %v823 = vpop.f32.mrf.mxu0
      %v824 = vadd.f32 %v300, %v823
      %825 = vmatmul.f32.gmra.mxu0 %v375
      %v826 = vpop.f32.mrf.mxu0
      %v827 = vadd.f32 %v300, %v826
      %828 = vmatmul.f32.gmra.mxu0 %v378
      %v829 = vpop.f32.mrf.mxu0
      %v830 = vadd.f32 %v300, %v829
      %831 = vmatmul.f32.gmra.mxu0 %v381
      %v832 = vpop.f32.mrf.mxu0
      %v833 = vadd.f32 %v300, %v832
      %834 = vmatmul.f32.gmra.mxu0 %v384
      %v835 = vpop.f32.mrf.mxu0
      %v836 = vadd.f32 %v300, %v835
      %837 = vmatmul.f32.gmra.mxu0 %v387
      %v838 = vpop.f32.mrf.mxu0
      %v839 = vadd.f32 %v300, %v838
      %840 = vmatmul.f32.gmra.mxu0 %v390
      %v841 = vpop.f32.mrf.mxu0
      %v842 = vadd.f32 %v300, %v841
      %843 = vmatmul.f32.gmra.mxu0 %v393
      %v844 = vpop.f32.mrf.mxu0
      %v845 = vadd.f32 %v300, %v844
      %846 = vmatmul.f32.gmra.mxu0 %v396
      %v847 = vpop.f32.mrf.mxu0
      %v848 = vadd.f32 %v300, %v847
      %849 = vmatmul.f32.gmra.mxu0 %v399
      %v850 = vpop.f32.mrf.mxu0
      %v851 = vadd.f32 %v300, %v850
      %852 = vmatmul.f32.gmra.mxu0 %v402
      %v853 = vpop.f32.mrf.mxu0
      %v854 = vadd.f32 %v300, %v853
      %855 = vdwg.mxu0
      %856 = vmatpush.msra.mxu0 0.0
      %857 = vmatpush.msra.mxu0 0.0
      %858 = vmatpush.msra.mxu0 0.0
      %859 = vmatpush.msra.mxu0 0.0
      %860 = vmatpush.msra.mxu0 0.0
      %861 = vmatpush.msra.mxu0 0.0
      %862 = vmatpush.msra.mxu0 0.0
      %863 = vmatpush.msra.mxu0 0.0
      %864 = vmatpush.msra.mxu0 %v294
      %865 = vmatpush.msra.mxu0 %v289
      %866 = vmatpush.msra.mxu0 %v284
      %867 = vmatpush.msra.mxu0 %v279
      %868 = vmatpush.msra.mxu0 %v274
      %869 = vmatpush.msra.mxu0 %v269
      %870 = vmatpush.msra.mxu0 %v264
      %871 = vmatpush.msra.mxu0 %v259
      %872 = vmatmul.f32.gmra.mxu0 %v309
      %v873 = vpop.f32.mrf.mxu0
      %v874 = vadd.f32 %v301, %v873
      %875 = vmatmul.f32.gmra.mxu0 %v312
      %v876 = vpop.f32.mrf.mxu0
      %v877 = vadd.f32 %v301, %v876
      %878 = vmatmul.f32.gmra.mxu0 %v315
      %v879 = vpop.f32.mrf.mxu0
      %v880 = vadd.f32 %v301, %v879
      %881 = vmatmul.f32.gmra.mxu0 %v318
      %v882 = vpop.f32.mrf.mxu0
      %v883 = vadd.f32 %v301, %v882
      %884 = vmatmul.f32.gmra.mxu0 %v321
      %v885 = vpop.f32.mrf.mxu0
      %v886 = vadd.f32 %v301, %v885
      %887 = vmatmul.f32.gmra.mxu0 %v324
      %v888 = vpop.f32.mrf.mxu0
      %v889 = vadd.f32 %v301, %v888
      %890 = vmatmul.f32.gmra.mxu0 %v327
      %v891 = vpop.f32.mrf.mxu0
      %v892 = vadd.f32 %v301, %v891
      %893 = vmatmul.f32.gmra.mxu0 %v330
      %v894 = vpop.f32.mrf.mxu0
      %v895 = vadd.f32 %v301, %v894
      %896 = vmatmul.f32.gmra.mxu0 %v333
      %v897 = vpop.f32.mrf.mxu0
      %v898 = vadd.f32 %v301, %v897
      %899 = vmatmul.f32.gmra.mxu0 %v336
      %v900 = vpop.f32.mrf.mxu0
      %v901 = vadd.f32 %v301, %v900
      %902 = vmatmul.f32.gmra.mxu0 %v339
      %v903 = vpop.f32.mrf.mxu0
      %v904 = vadd.f32 %v301, %v903
      %905 = vmatmul.f32.gmra.mxu0 %v342
      %v906 = vpop.f32.mrf.mxu0
      %v907 = vadd.f32 %v301, %v906
      %908 = vmatmul.f32.gmra.mxu0 %v345
      %v909 = vpop.f32.mrf.mxu0
      %v910 = vadd.f32 %v301, %v909
      %911 = vmatmul.f32.gmra.mxu0 %v348
      %v912 = vpop.f32.mrf.mxu0
      %v913 = vadd.f32 %v301, %v912
      %914 = vmatmul.f32.gmra.mxu0 %v351
      %v915 = vpop.f32.mrf.mxu0
      %v916 = vadd.f32 %v301, %v915
      %917 = vmatmul.f32.gmra.mxu0 %v354
      %v918 = vpop.f32.mrf.mxu0
      %v919 = vadd.f32 %v301, %v918
      %920 = vmatmul.f32.gmra.mxu0 %v357
      %v921 = vpop.f32.mrf.mxu0
      %v922 = vadd.f32 %v301, %v921
      %923 = vmatmul.f32.gmra.mxu0 %v360
      %v924 = vpop.f32.mrf.mxu0
      %v925 = vadd.f32 %v301, %v924
      %926 = vmatmul.f32.gmra.mxu0 %v363
      %v927 = vpop.f32.mrf.mxu0
      %v928 = vadd.f32 %v301, %v927
      %929 = vmatmul.f32.gmra.mxu0 %v366
      %v930 = vpop.f32.mrf.mxu0
      %v931 = vadd.f32 %v301, %v930
      %932 = vmatmul.f32.gmra.mxu0 %v369
      %v933 = vpop.f32.mrf.mxu0
      %v934 = vadd.f32 %v301, %v933
      %935 = vmatmul.f32.gmra.mxu0 %v372
      %v936 = vpop.f32.mrf.mxu0
      %v937 = vadd.f32 %v301, %v936
      %938 = vmatmul.f32.gmra.mxu0 %v375
      %v939 = vpop.f32.mrf.mxu0
      %v940 = vadd.f32 %v301, %v939
      %941 = vmatmul.f32.gmra.mxu0 %v378
      %v942 = vpop.f32.mrf.mxu0
      %v943 = vadd.f32 %v301, %v942
      %944 = vmatmul.f32.gmra.mxu0 %v381
      %v945 = vpop.f32.mrf.mxu0
      %v946 = vadd.f32 %v301, %v945
      %947 = vmatmul.f32.gmra.mxu0 %v384
      %v948 = vpop.f32.mrf.mxu0
      %v949 = vadd.f32 %v301, %v948
      %950 = vmatmul.f32.gmra.mxu0 %v387
      %v951 = vpop.f32.mrf.mxu0
      %v952 = vadd.f32 %v301, %v951
      %953 = vmatmul.f32.gmra.mxu0 %v390
      %v954 = vpop.f32.mrf.mxu0
      %v955 = vadd.f32 %v301, %v954
      %956 = vmatmul.f32.gmra.mxu0 %v393
      %v957 = vpop.f32.mrf.mxu0
      %v958 = vadd.f32 %v301, %v957
      %959 = vmatmul.f32.gmra.mxu0 %v396
      %v960 = vpop.f32.mrf.mxu0
      %v961 = vadd.f32 %v301, %v960
      %962 = vmatmul.f32.gmra.mxu0 %v399
      %v963 = vpop.f32.mrf.mxu0
      %v964 = vadd.f32 %v301, %v963
      %965 = vmatmul.f32.gmra.mxu0 %v402
      %v966 = vpop.f32.mrf.mxu0
      %v967 = vadd.f32 %v301, %v966
      %968 = vdwg.mxu0
      %v969 = vand.u32 2147483647, %v422
      %v970 = vand.u32 2147483647, %v535
      %v971 = vand.u32 2147483647, %v425
      %v972 = vand.u32 2147483647, %v538
      %v973 = vand.u32 2147483647, %v428
      %v974 = vand.u32 2147483647, %v541
      %v975 = vand.u32 2147483647, %v431
      %v976 = vand.u32 2147483647, %v544
      %v977 = vand.u32 2147483647, %v434
      %v978 = vand.u32 2147483647, %v547
      %v979 = vand.u32 2147483647, %v437
      %v980 = vand.u32 2147483647, %v550
      %v981 = vand.u32 2147483647, %v440
      %v982 = vand.u32 2147483647, %v553
      %v983 = vand.u32 2147483647, %v443
      %v984 = vand.u32 2147483647, %v556
      %v985 = vand.u32 2147483647, %v446
      %v986 = vand.u32 2147483647, %v559
      %v987 = vand.u32 2147483647, %v449
      %v988 = vand.u32 2147483647, %v562
      %v989 = vand.u32 2147483647, %v452
      %v990 = vand.u32 2147483647, %v565
      %v991 = vand.u32 2147483647, %v455
      %v992 = vand.u32 2147483647, %v568
      %v993 = vand.u32 2147483647, %v458
      %v994 = vand.u32 2147483647, %v571
      %v995 = vand.u32 2147483647, %v461
      %v996 = vand.u32 2147483647, %v574
      %v997 = vand.u32 2147483647, %v464
      %v998 = vand.u32 2147483647, %v577
      %v999 = vand.u32 2147483647, %v467
      %v1000 = vand.u32 2147483647, %v580
      %v1001 = vand.u32 2147483647, %v470
      %v1002 = vand.u32 2147483647, %v583
      %v1003 = vand.u32 2147483647, %v473
      %v1004 = vand.u32 2147483647, %v586
      %v1005 = vand.u32 2147483647, %v476
      %v1006 = vand.u32 2147483647, %v589
      %v1007 = vand.u32 2147483647, %v479
      %v1008 = vand.u32 2147483647, %v592
      %v1009 = vand.u32 2147483647, %v482
      %v1010 = vand.u32 2147483647, %v595
      %v1011 = vand.u32 2147483647, %v485
      %v1012 = vand.u32 2147483647, %v598
      %v1013 = vand.u32 2147483647, %v488
      %v1014 = vand.u32 2147483647, %v601
      %v1015 = vand.u32 2147483647, %v491
      %v1016 = vand.u32 2147483647, %v604
      %v1017 = vand.u32 2147483647, %v494
      %v1018 = vand.u32 2147483647, %v607
      %v1019 = vand.u32 2147483647, %v497
      %v1020 = vand.u32 2147483647, %v610
      %v1021 = vand.u32 2147483647, %v500
      %v1022 = vand.u32 2147483647, %v613
      %v1023 = vand.u32 2147483647, %v503
      %v1024 = vand.u32 2147483647, %v616
      %v1025 = vand.u32 2147483647, %v506
      %v1026 = vand.u32 2147483647, %v619
      %v1027 = vand.u32 2147483647, %v509
      %v1028 = vand.u32 2147483647, %v622
      %v1029 = vand.u32 2147483647, %v512
      %v1030 = vand.u32 2147483647, %v625
      %v1031 = vand.u32 2147483647, %v515
      %v1032 = vand.u32 2147483647, %v628
      %v1033 = vand.u32 2147483647, %v761
      %v1034 = vand.u32 2147483647, %v764
      %v1035 = vand.u32 2147483647, %v767
      %v1036 = vand.u32 2147483647, %v770
      %v1037 = vand.u32 2147483647, %v773
      %v1038 = vand.u32 2147483647, %v776
      %v1039 = vand.u32 2147483647, %v779
      %v1040 = vand.u32 2147483647, %v782
      %v1041 = vand.u32 2147483647, %v785
      %v1042 = vand.u32 2147483647, %v788
      %v1043 = vand.u32 2147483647, %v791
      %v1044 = vand.u32 2147483647, %v794
      %v1045 = vand.u32 2147483647, %v797
      %v1046 = vand.u32 2147483647, %v800
      %v1047 = vand.u32 2147483647, %v803
      %v1048 = vand.u32 2147483647, %v806
      %v1049 = vand.u32 2147483647, %v809
      %v1050 = vand.u32 2147483647, %v812
      %v1051 = vand.u32 2147483647, %v815
      %v1052 = vand.u32 2147483647, %v818
      %v1053 = vand.u32 2147483647, %v821
      %v1054 = vand.u32 2147483647, %v824
      %v1055 = vand.u32 2147483647, %v827
      %v1056 = vand.u32 2147483647, %v830
      %v1057 = vand.u32 2147483647, %v833
      %v1058 = vand.u32 2147483647, %v836
      %v1059 = vand.u32 2147483647, %v839
      %v1060 = vand.u32 2147483647, %v842
      %v1061 = vand.u32 2147483647, %v845
      %v1062 = vand.u32 2147483647, %v848
      %v1063 = vand.u32 2147483647, %v851
      %v1064 = vand.u32 2147483647, %v854
      %v1065 = vld [vmem:[%s209] sm:$0xff]
      %v1066 = vld [vmem:[%s209 + $0x8] sm:$0xff]
      %v1067 = vld [vmem:[%s209 + $0x10] sm:$0xff]
      %v1068 = vld [vmem:[%s209 + $0x18] sm:$0xff]
      %v1069 = vld [vmem:[%s209 + $0x20] sm:$0xff]
      %v1070 = vld [vmem:[%s209 + $0x28] sm:$0xff]
      %v1071 = vld [vmem:[%s209 + $0x30] sm:$0xff]
      %v1072 = vld [vmem:[%s209 + $0x38] sm:$0xff]
      %v1073 = vld [vmem:[%s209 + $0x40] sm:$0xff]
      %v1074 = vld [vmem:[%s209 + $0x48] sm:$0xff]
      %v1075 = vld [vmem:[%s209 + $0x50] sm:$0xff]
      %v1076 = vld [vmem:[%s209 + $0x58] sm:$0xff]
      %v1077 = vld [vmem:[%s209 + $0x60] sm:$0xff]
      %v1078 = vld [vmem:[%s209 + $0x68] sm:$0xff]
      %v1079 = vld [vmem:[%s209 + $0x70] sm:$0xff]
      %v1080 = vld [vmem:[%s209 + $0x78] sm:$0xff]
      %v1081 = vld [vmem:[%s209 + $0x80] sm:$0xff]
      %v1082 = vld [vmem:[%s209 + $0x88] sm:$0xff]
      %v1083 = vld [vmem:[%s209 + $0x90] sm:$0xff]
      %v1084 = vld [vmem:[%s209 + $0x98] sm:$0xff]
      %v1085 = vld [vmem:[%s209 + $0xa0] sm:$0xff]
      %v1086 = vld [vmem:[%s209 + $0xa8] sm:$0xff]
      %v1087 = vld [vmem:[%s209 + $0xb0] sm:$0xff]
      %v1088 = vld [vmem:[%s209 + $0xb8] sm:$0xff]
      %v1089 = vld [vmem:[%s209 + $0xc0] sm:$0xff]
      %v1090 = vld [vmem:[%s209 + $0xc8] sm:$0xff]
      %v1091 = vld [vmem:[%s209 + $0xd0] sm:$0xff]
      %v1092 = vld [vmem:[%s209 + $0xd8] sm:$0xff]
      %v1093 = vld [vmem:[%s209 + $0xe0] sm:$0xff]
      %v1094 = vld [vmem:[%s209 + $0xe8] sm:$0xff]
      %v1095 = vld [vmem:[%s209 + $0xf0] sm:$0xff]
      %v1096 = vld [vmem:[%s209 + $0xf8] sm:$0xff]
      %1098 = vset.pattern.permute.xlu0 0
      %1099 = vperm.xlu0 %1098, %v1065
      %v1100 = vpop.permute.xlu0 %1099
      %1103 = vset.pattern.permute.xlu0 0
      %1104 = vperm.xlu0 %1103, %v1066
      %v1105 = vpop.permute.xlu0 %1104
      %1108 = vset.pattern.permute.xlu0 0
      %1109 = vperm.xlu0 %1108, %v1067
      %v1110 = vpop.permute.xlu0 %1109
      %1113 = vset.pattern.permute.xlu0 0
      %1114 = vperm.xlu0 %1113, %v1068
      %v1115 = vpop.permute.xlu0 %1114
      %1118 = vset.pattern.permute.xlu0 0
      %1119 = vperm.xlu0 %1118, %v1069
      %v1120 = vpop.permute.xlu0 %1119
      %1123 = vset.pattern.permute.xlu0 0
      %1124 = vperm.xlu0 %1123, %v1070
      %v1125 = vpop.permute.xlu0 %1124
      %1128 = vset.pattern.permute.xlu0 0
      %1129 = vperm.xlu0 %1128, %v1071
      %v1130 = vpop.permute.xlu0 %1129
      %1133 = vset.pattern.permute.xlu0 0
      %1134 = vperm.xlu0 %1133, %v1072
      %v1135 = vpop.permute.xlu0 %1134
      %1138 = vset.pattern.permute.xlu0 0
      %1139 = vperm.xlu0 %1138, %v1073
      %v1140 = vpop.permute.xlu0 %1139
      %1143 = vset.pattern.permute.xlu0 0
      %1144 = vperm.xlu0 %1143, %v1074
      %v1145 = vpop.permute.xlu0 %1144
      %1148 = vset.pattern.permute.xlu0 0
      %1149 = vperm.xlu0 %1148, %v1075
      %v1150 = vpop.permute.xlu0 %1149
      %1153 = vset.pattern.permute.xlu0 0
      %1154 = vperm.xlu0 %1153, %v1076
      %v1155 = vpop.permute.xlu0 %1154
      %1158 = vset.pattern.permute.xlu0 0
      %1159 = vperm.xlu0 %1158, %v1077
      %v1160 = vpop.permute.xlu0 %1159
      %1163 = vset.pattern.permute.xlu0 0
      %1164 = vperm.xlu0 %1163, %v1078
      %v1165 = vpop.permute.xlu0 %1164
      %1168 = vset.pattern.permute.xlu0 0
      %1169 = vperm.xlu0 %1168, %v1079
      %v1170 = vpop.permute.xlu0 %1169
      %1173 = vset.pattern.permute.xlu0 0
      %1174 = vperm.xlu0 %1173, %v1080
      %v1175 = vpop.permute.xlu0 %1174
      %1178 = vset.pattern.permute.xlu0 0
      %1179 = vperm.xlu0 %1178, %v1081
      %v1180 = vpop.permute.xlu0 %1179
      %1183 = vset.pattern.permute.xlu0 0
      %1184 = vperm.xlu0 %1183, %v1082
      %v1185 = vpop.permute.xlu0 %1184
      %1188 = vset.pattern.permute.xlu0 0
      %1189 = vperm.xlu0 %1188, %v1083
      %v1190 = vpop.permute.xlu0 %1189
      %1193 = vset.pattern.permute.xlu0 0
      %1194 = vperm.xlu0 %1193, %v1084
      %v1195 = vpop.permute.xlu0 %1194
      %1198 = vset.pattern.permute.xlu0 0
      %1199 = vperm.xlu0 %1198, %v1085
      %v1200 = vpop.permute.xlu0 %1199
      %1203 = vset.pattern.permute.xlu0 0
      %1204 = vperm.xlu0 %1203, %v1086
      %v1205 = vpop.permute.xlu0 %1204
      %1208 = vset.pattern.permute.xlu0 0
      %1209 = vperm.xlu0 %1208, %v1087
      %v1210 = vpop.permute.xlu0 %1209
      %1213 = vset.pattern.permute.xlu0 0
      %1214 = vperm.xlu0 %1213, %v1088
      %v1215 = vpop.permute.xlu0 %1214
      %1218 = vset.pattern.permute.xlu0 0
      %1219 = vperm.xlu0 %1218, %v1089
      %v1220 = vpop.permute.xlu0 %1219
      %1223 = vset.pattern.permute.xlu0 0
      %1224 = vperm.xlu0 %1223, %v1090
      %v1225 = vpop.permute.xlu0 %1224
      %1228 = vset.pattern.permute.xlu0 0
      %1229 = vperm.xlu0 %1228, %v1091
      %v1230 = vpop.permute.xlu0 %1229
      %1233 = vset.pattern.permute.xlu0 0
      %1234 = vperm.xlu0 %1233, %v1092
      %v1235 = vpop.permute.xlu0 %1234
      %1238 = vset.pattern.permute.xlu0 0
      %1239 = vperm.xlu0 %1238, %v1093
      %v1240 = vpop.permute.xlu0 %1239
      %1243 = vset.pattern.permute.xlu0 0
      %1244 = vperm.xlu0 %1243, %v1094
      %v1245 = vpop.permute.xlu0 %1244
      %1248 = vset.pattern.permute.xlu0 0
      %1249 = vperm.xlu0 %1248, %v1095
      %v1250 = vpop.permute.xlu0 %1249
      %1253 = vset.pattern.permute.xlu0 0
      %1254 = vperm.xlu0 %1253, %v1096
      %v1255 = vpop.permute.xlu0 %1254
      %v1257 = vmul.f32 %v1100, %v969
      %v1258 = vmul.f32 %v1105, %v971
      %v1259 = vmul.f32 %v1110, %v973
      %v1260 = vmul.f32 %v1115, %v975
      %v1261 = vmul.f32 %v1120, %v977
      %v1262 = vmul.f32 %v1125, %v979
      %v1263 = vmul.f32 %v1130, %v981
      %v1264 = vmul.f32 %v1135, %v983
      %v1265 = vmul.f32 %v1140, %v985
      %v1266 = vmul.f32 %v1145, %v987
      %v1267 = vmul.f32 %v1150, %v989
      %v1268 = vmul.f32 %v1155, %v991
      %v1269 = vmul.f32 %v1160, %v993
      %v1270 = vmul.f32 %v1165, %v995
      %v1271 = vmul.f32 %v1170, %v997
      %v1272 = vmul.f32 %v1175, %v999
      %v1273 = vmul.f32 %v1180, %v1001
      %v1274 = vmul.f32 %v1185, %v1003
      %v1275 = vmul.f32 %v1190, %v1005
      %v1276 = vmul.f32 %v1195, %v1007
      %v1277 = vmul.f32 %v1200, %v1009
      %v1278 = vmul.f32 %v1205, %v1011
      %v1279 = vmul.f32 %v1210, %v1013
      %v1280 = vmul.f32 %v1215, %v1015
      %v1281 = vmul.f32 %v1220, %v1017
      %v1282 = vmul.f32 %v1225, %v1019
      %v1283 = vmul.f32 %v1230, %v1021
      %v1284 = vmul.f32 %v1235, %v1023
      %v1285 = vmul.f32 %v1240, %v1025
      %v1286 = vmul.f32 %v1245, %v1027
      %v1287 = vmul.f32 %v1250, %v1029
      %v1288 = vmul.f32 %v1255, %v1031
      %v1289 = vadd.f32 %v648, %v1257
      %v1290 = vadd.f32 %v651, %v1258
      %v1291 = vadd.f32 %v654, %v1259
      %v1292 = vadd.f32 %v657, %v1260
      %v1293 = vadd.f32 %v660, %v1261
      %v1294 = vadd.f32 %v663, %v1262
      %v1295 = vadd.f32 %v666, %v1263
      %v1296 = vadd.f32 %v669, %v1264
      %v1297 = vadd.f32 %v672, %v1265
      %v1298 = vadd.f32 %v675, %v1266
      %v1299 = vadd.f32 %v678, %v1267
      %v1300 = vadd.f32 %v681, %v1268
      %v1301 = vadd.f32 %v684, %v1269
      %v1302 = vadd.f32 %v687, %v1270
      %v1303 = vadd.f32 %v690, %v1271
      %v1304 = vadd.f32 %v693, %v1272
      %v1305 = vadd.f32 %v696, %v1273
      %v1306 = vadd.f32 %v699, %v1274
      %v1307 = vadd.f32 %v702, %v1275
      %v1308 = vadd.f32 %v705, %v1276
      %v1309 = vadd.f32 %v708, %v1277
      %v1310 = vadd.f32 %v711, %v1278
      %v1311 = vadd.f32 %v714, %v1279
      %v1312 = vadd.f32 %v717, %v1280
      %v1313 = vadd.f32 %v720, %v1281
      %v1314 = vadd.f32 %v723, %v1282
      %v1315 = vadd.f32 %v726, %v1283
      %v1316 = vadd.f32 %v729, %v1284
      %v1317 = vadd.f32 %v732, %v1285
      %v1318 = vadd.f32 %v735, %v1286
      %v1319 = vadd.f32 %v738, %v1287
      %v1320 = vadd.f32 %v741, %v1288
      %1321 = vset.pattern.permute.xlu0 1
      %1322 = vperm.xlu0 %1321, %v1065
      %v1323 = vpop.permute.xlu0 %1322
      %1325 = vset.pattern.permute.xlu0 1
      %1326 = vperm.xlu0 %1325, %v1066
      %v1327 = vpop.permute.xlu0 %1326
      %1329 = vset.pattern.permute.xlu0 1
      %1330 = vperm.xlu0 %1329, %v1067
      %v1331 = vpop.permute.xlu0 %1330
      %1333 = vset.pattern.permute.xlu0 1
      %1334 = vperm.xlu0 %1333, %v1068
      %v1335 = vpop.permute.xlu0 %1334
      %1337 = vset.pattern.permute.xlu0 1
      %1338 = vperm.xlu0 %1337, %v1069
      %v1339 = vpop.permute.xlu0 %1338
      %1341 = vset.pattern.permute.xlu0 1
      %1342 = vperm.xlu0 %1341, %v1070
      %v1343 = vpop.permute.xlu0 %1342
      %1345 = vset.pattern.permute.xlu0 1
      %1346 = vperm.xlu0 %1345, %v1071
      %v1347 = vpop.permute.xlu0 %1346
      %1349 = vset.pattern.permute.xlu0 1
      %1350 = vperm.xlu0 %1349, %v1072
      %v1351 = vpop.permute.xlu0 %1350
      %1353 = vset.pattern.permute.xlu0 1
      %1354 = vperm.xlu0 %1353, %v1073
      %v1355 = vpop.permute.xlu0 %1354
      %1357 = vset.pattern.permute.xlu0 1
      %1358 = vperm.xlu0 %1357, %v1074
      %v1359 = vpop.permute.xlu0 %1358
      %1361 = vset.pattern.permute.xlu0 1
      %1362 = vperm.xlu0 %1361, %v1075
      %v1363 = vpop.permute.xlu0 %1362
      %1365 = vset.pattern.permute.xlu0 1
      %1366 = vperm.xlu0 %1365, %v1076
      %v1367 = vpop.permute.xlu0 %1366
      %1369 = vset.pattern.permute.xlu0 1
      %1370 = vperm.xlu0 %1369, %v1077
      %v1371 = vpop.permute.xlu0 %1370
      %1373 = vset.pattern.permute.xlu0 1
      %1374 = vperm.xlu0 %1373, %v1078
      %v1375 = vpop.permute.xlu0 %1374
      %1377 = vset.pattern.permute.xlu0 1
      %1378 = vperm.xlu0 %1377, %v1079
      %v1379 = vpop.permute.xlu0 %1378
      %1381 = vset.pattern.permute.xlu0 1
      %1382 = vperm.xlu0 %1381, %v1080
      %v1383 = vpop.permute.xlu0 %1382
      %1385 = vset.pattern.permute.xlu0 1
      %1386 = vperm.xlu0 %1385, %v1081
      %v1387 = vpop.permute.xlu0 %1386
      %1389 = vset.pattern.permute.xlu0 1
      %1390 = vperm.xlu0 %1389, %v1082
      %v1391 = vpop.permute.xlu0 %1390
      %1393 = vset.pattern.permute.xlu0 1
      %1394 = vperm.xlu0 %1393, %v1083
      %v1395 = vpop.permute.xlu0 %1394
      %1397 = vset.pattern.permute.xlu0 1
      %1398 = vperm.xlu0 %1397, %v1084
      %v1399 = vpop.permute.xlu0 %1398
      %1401 = vset.pattern.permute.xlu0 1
      %1402 = vperm.xlu0 %1401, %v1085
      %v1403 = vpop.permute.xlu0 %1402
      %1405 = vset.pattern.permute.xlu0 1
      %1406 = vperm.xlu0 %1405, %v1086
      %v1407 = vpop.permute.xlu0 %1406
      %1409 = vset.pattern.permute.xlu0 1
      %1410 = vperm.xlu0 %1409, %v1087
      %v1411 = vpop.permute.xlu0 %1410
      %1413 = vset.pattern.permute.xlu0 1
      %1414 = vperm.xlu0 %1413, %v1088
      %v1415 = vpop.permute.xlu0 %1414
      %1417 = vset.pattern.permute.xlu0 1
      %1418 = vperm.xlu0 %1417, %v1089
      %v1419 = vpop.permute.xlu0 %1418
      %1421 = vset.pattern.permute.xlu0 1
      %1422 = vperm.xlu0 %1421, %v1090
      %v1423 = vpop.permute.xlu0 %1422
      %1425 = vset.pattern.permute.xlu0 1
      %1426 = vperm.xlu0 %1425, %v1091
      %v1427 = vpop.permute.xlu0 %1426
      %1429 = vset.pattern.permute.xlu0 1
      %1430 = vperm.xlu0 %1429, %v1092
      %v1431 = vpop.permute.xlu0 %1430
      %1433 = vset.pattern.permute.xlu0 1
      %1434 = vperm.xlu0 %1433, %v1093
      %v1435 = vpop.permute.xlu0 %1434
      %1437 = vset.pattern.permute.xlu0 1
      %1438 = vperm.xlu0 %1437, %v1094
      %v1439 = vpop.permute.xlu0 %1438
      %1441 = vset.pattern.permute.xlu0 1
      %1442 = vperm.xlu0 %1441, %v1095
      %v1443 = vpop.permute.xlu0 %1442
      %1445 = vset.pattern.permute.xlu0 1
      %1446 = vperm.xlu0 %1445, %v1096
      %v1447 = vpop.permute.xlu0 %1446
      %v1449 = vmul.f32 %v1323, %v969
      %v1450 = vmul.f32 %v1327, %v971
      %v1451 = vmul.f32 %v1331, %v973
      %v1452 = vmul.f32 %v1335, %v975
      %v1453 = vmul.f32 %v1339, %v977
      %v1454 = vmul.f32 %v1343, %v979
      %v1455 = vmul.f32 %v1347, %v981
      %v1456 = vmul.f32 %v1351, %v983
      %v1457 = vmul.f32 %v1355, %v985
      %v1458 = vmul.f32 %v1359, %v987
      %v1459 = vmul.f32 %v1363, %v989
      %v1460 = vmul.f32 %v1367, %v991
      %v1461 = vmul.f32 %v1371, %v993
      %v1462 = vmul.f32 %v1375, %v995
      %v1463 = vmul.f32 %v1379, %v997
      %v1464 = vmul.f32 %v1383, %v999
      %v1465 = vmul.f32 %v1387, %v1001
      %v1466 = vmul.f32 %v1391, %v1003
      %v1467 = vmul.f32 %v1395, %v1005
      %v1468 = vmul.f32 %v1399, %v1007
      %v1469 = vmul.f32 %v1403, %v1009
      %v1470 = vmul.f32 %v1407, %v1011
      %v1471 = vmul.f32 %v1411, %v1013
      %v1472 = vmul.f32 %v1415, %v1015
      %v1473 = vmul.f32 %v1419, %v1017
      %v1474 = vmul.f32 %v1423, %v1019
      %v1475 = vmul.f32 %v1427, %v1021
      %v1476 = vmul.f32 %v1431, %v1023
      %v1477 = vmul.f32 %v1435, %v1025
      %v1478 = vmul.f32 %v1439, %v1027
      %v1479 = vmul.f32 %v1443, %v1029
      %v1480 = vmul.f32 %v1447, %v1031
      %1513 = vrot.lane.b32.xlu0 %v1449, 96
      %v1514 = vpop.permute.xlu0 %1513
      %1515 = vrot.lane.b32.xlu0 %v1450, 96
      %v1516 = vpop.permute.xlu0 %1515
      %1517 = vrot.lane.b32.xlu0 %v1451, 96
      %v1518 = vpop.permute.xlu0 %1517
      %1519 = vrot.lane.b32.xlu0 %v1452, 96
      %v1520 = vpop.permute.xlu0 %1519
      %1521 = vrot.lane.b32.xlu0 %v1453, 96
      %v1522 = vpop.permute.xlu0 %1521
      %1523 = vrot.lane.b32.xlu0 %v1454, 96
      %v1524 = vpop.permute.xlu0 %1523
      %1525 = vrot.lane.b32.xlu0 %v1455, 96
      %v1526 = vpop.permute.xlu0 %1525
      %1527 = vrot.lane.b32.xlu0 %v1456, 96
      %v1528 = vpop.permute.xlu0 %1527
      %1529 = vrot.lane.b32.xlu0 %v1457, 96
      %v1530 = vpop.permute.xlu0 %1529
      %1531 = vrot.lane.b32.xlu0 %v1458, 96
      %v1532 = vpop.permute.xlu0 %1531
      %1533 = vrot.lane.b32.xlu0 %v1459, 96
      %v1534 = vpop.permute.xlu0 %1533
      %1535 = vrot.lane.b32.xlu0 %v1460, 96
      %v1536 = vpop.permute.xlu0 %1535
      %1537 = vrot.lane.b32.xlu0 %v1461, 96
      %v1538 = vpop.permute.xlu0 %1537
      %1539 = vrot.lane.b32.xlu0 %v1462, 96
      %v1540 = vpop.permute.xlu0 %1539
      %1541 = vrot.lane.b32.xlu0 %v1463, 96
      %v1542 = vpop.permute.xlu0 %1541
      %1543 = vrot.lane.b32.xlu0 %v1464, 96
      %v1544 = vpop.permute.xlu0 %1543
      %1545 = vrot.lane.b32.xlu0 %v1465, 96
      %v1546 = vpop.permute.xlu0 %1545
      %1547 = vrot.lane.b32.xlu0 %v1466, 96
      %v1548 = vpop.permute.xlu0 %1547
      %1549 = vrot.lane.b32.xlu0 %v1467, 96
      %v1550 = vpop.permute.xlu0 %1549
      %1551 = vrot.lane.b32.xlu0 %v1468, 96
      %v1552 = vpop.permute.xlu0 %1551
      %1553 = vrot.lane.b32.xlu0 %v1469, 96
      %v1554 = vpop.permute.xlu0 %1553
      %1555 = vrot.lane.b32.xlu0 %v1470, 96
      %v1556 = vpop.permute.xlu0 %1555
      %1557 = vrot.lane.b32.xlu0 %v1471, 96
      %v1558 = vpop.permute.xlu0 %1557
      %1559 = vrot.lane.b32.xlu0 %v1472, 96
      %v1560 = vpop.permute.xlu0 %1559
      %1561 = vrot.lane.b32.xlu0 %v1473, 96
      %v1562 = vpop.permute.xlu0 %1561
      %1563 = vrot.lane.b32.xlu0 %v1474, 96
      %v1564 = vpop.permute.xlu0 %1563
      %1565 = vrot.lane.b32.xlu0 %v1475, 96
      %v1566 = vpop.permute.xlu0 %1565
      %1567 = vrot.lane.b32.xlu0 %v1476, 96
      %v1568 = vpop.permute.xlu0 %1567
      %1569 = vrot.lane.b32.xlu0 %v1477, 96
      %v1570 = vpop.permute.xlu0 %1569
      %1571 = vrot.lane.b32.xlu0 %v1478, 96
      %v1572 = vpop.permute.xlu0 %1571
      %1573 = vrot.lane.b32.xlu0 %v1479, 96
      %v1574 = vpop.permute.xlu0 %1573
      %1575 = vrot.lane.b32.xlu0 %v1480, 96
      %v1576 = vpop.permute.xlu0 %1575
      %v1609 = vadd.f32 %v1289, %v1514
      %v1610 = vadd.f32 %v1290, %v1516
      %v1611 = vadd.f32 %v1291, %v1518
      %v1612 = vadd.f32 %v1292, %v1520
      %v1613 = vadd.f32 %v1293, %v1522
      %v1614 = vadd.f32 %v1294, %v1524
      %v1615 = vadd.f32 %v1295, %v1526
      %v1616 = vadd.f32 %v1296, %v1528
      %v1617 = vadd.f32 %v1297, %v1530
      %v1618 = vadd.f32 %v1298, %v1532
      %v1619 = vadd.f32 %v1299, %v1534
      %v1620 = vadd.f32 %v1300, %v1536
      %v1621 = vadd.f32 %v1301, %v1538
      %v1622 = vadd.f32 %v1302, %v1540
      %v1623 = vadd.f32 %v1303, %v1542
      %v1624 = vadd.f32 %v1304, %v1544
      %v1625 = vadd.f32 %v1305, %v1546
      %v1626 = vadd.f32 %v1306, %v1548
      %v1627 = vadd.f32 %v1307, %v1550
      %v1628 = vadd.f32 %v1308, %v1552
      %v1629 = vadd.f32 %v1309, %v1554
      %v1630 = vadd.f32 %v1310, %v1556
      %v1631 = vadd.f32 %v1311, %v1558
      %v1632 = vadd.f32 %v1312, %v1560
      %v1633 = vadd.f32 %v1313, %v1562
      %v1634 = vadd.f32 %v1314, %v1564
      %v1635 = vadd.f32 %v1315, %v1566
      %v1636 = vadd.f32 %v1316, %v1568
      %v1637 = vadd.f32 %v1317, %v1570
      %v1638 = vadd.f32 %v1318, %v1572
      %v1639 = vadd.f32 %v1319, %v1574
      %v1640 = vadd.f32 %v1320, %v1576
      %1641 = vset.pattern.permute.xlu0 2
      %1642 = vperm.xlu0 %1641, %v1065
      %v1643 = vpop.permute.xlu0 %1642
      %1645 = vset.pattern.permute.xlu0 2
      %1646 = vperm.xlu0 %1645, %v1066
      %v1647 = vpop.permute.xlu0 %1646
      %1649 = vset.pattern.permute.xlu0 2
      %1650 = vperm.xlu0 %1649, %v1067
      %v1651 = vpop.permute.xlu0 %1650
      %1653 = vset.pattern.permute.xlu0 2
      %1654 = vperm.xlu0 %1653, %v1068
      %v1655 = vpop.permute.xlu0 %1654
      %1657 = vset.pattern.permute.xlu0 2
      %1658 = vperm.xlu0 %1657, %v1069
      %v1659 = vpop.permute.xlu0 %1658
      %1661 = vset.pattern.permute.xlu0 2
      %1662 = vperm.xlu0 %1661, %v1070
      %v1663 = vpop.permute.xlu0 %1662
      %1665 = vset.pattern.permute.xlu0 2
      %1666 = vperm.xlu0 %1665, %v1071
      %v1667 = vpop.permute.xlu0 %1666
      %1669 = vset.pattern.permute.xlu0 2
      %1670 = vperm.xlu0 %1669, %v1072
      %v1671 = vpop.permute.xlu0 %1670
      %1673 = vset.pattern.permute.xlu0 2
      %1674 = vperm.xlu0 %1673, %v1073
      %v1675 = vpop.permute.xlu0 %1674
      %1677 = vset.pattern.permute.xlu0 2
      %1678 = vperm.xlu0 %1677, %v1074
      %v1679 = vpop.permute.xlu0 %1678
      %1681 = vset.pattern.permute.xlu0 2
      %1682 = vperm.xlu0 %1681, %v1075
      %v1683 = vpop.permute.xlu0 %1682
      %1685 = vset.pattern.permute.xlu0 2
      %1686 = vperm.xlu0 %1685, %v1076
      %v1687 = vpop.permute.xlu0 %1686
      %1689 = vset.pattern.permute.xlu0 2
      %1690 = vperm.xlu0 %1689, %v1077
      %v1691 = vpop.permute.xlu0 %1690
      %1693 = vset.pattern.permute.xlu0 2
      %1694 = vperm.xlu0 %1693, %v1078
      %v1695 = vpop.permute.xlu0 %1694
      %1697 = vset.pattern.permute.xlu0 2
      %1698 = vperm.xlu0 %1697, %v1079
      %v1699 = vpop.permute.xlu0 %1698
      %1701 = vset.pattern.permute.xlu0 2
      %1702 = vperm.xlu0 %1701, %v1080
      %v1703 = vpop.permute.xlu0 %1702
      %1705 = vset.pattern.permute.xlu0 2
      %1706 = vperm.xlu0 %1705, %v1081
      %v1707 = vpop.permute.xlu0 %1706
      %1709 = vset.pattern.permute.xlu0 2
      %1710 = vperm.xlu0 %1709, %v1082
      %v1711 = vpop.permute.xlu0 %1710
      %1713 = vset.pattern.permute.xlu0 2
      %1714 = vperm.xlu0 %1713, %v1083
      %v1715 = vpop.permute.xlu0 %1714
      %1717 = vset.pattern.permute.xlu0 2
      %1718 = vperm.xlu0 %1717, %v1084
      %v1719 = vpop.permute.xlu0 %1718
      %1721 = vset.pattern.permute.xlu0 2
      %1722 = vperm.xlu0 %1721, %v1085
      %v1723 = vpop.permute.xlu0 %1722
      %1725 = vset.pattern.permute.xlu0 2
      %1726 = vperm.xlu0 %1725, %v1086
      %v1727 = vpop.permute.xlu0 %1726
      %1729 = vset.pattern.permute.xlu0 2
      %1730 = vperm.xlu0 %1729, %v1087
      %v1731 = vpop.permute.xlu0 %1730
      %1733 = vset.pattern.permute.xlu0 2
      %1734 = vperm.xlu0 %1733, %v1088
      %v1735 = vpop.permute.xlu0 %1734
      %1737 = vset.pattern.permute.xlu0 2
      %1738 = vperm.xlu0 %1737, %v1089
      %v1739 = vpop.permute.xlu0 %1738
      %1741 = vset.pattern.permute.xlu0 2
      %1742 = vperm.xlu0 %1741, %v1090
      %v1743 = vpop.permute.xlu0 %1742
      %1745 = vset.pattern.permute.xlu0 2
      %1746 = vperm.xlu0 %1745, %v1091
      %v1747 = vpop.permute.xlu0 %1746
      %1749 = vset.pattern.permute.xlu0 2
      %1750 = vperm.xlu0 %1749, %v1092
      %v1751 = vpop.permute.xlu0 %1750
      %1753 = vset.pattern.permute.xlu0 2
      %1754 = vperm.xlu0 %1753, %v1093
      %v1755 = vpop.permute.xlu0 %1754
      %1757 = vset.pattern.permute.xlu0 2
      %1758 = vperm.xlu0 %1757, %v1094
      %v1759 = vpop.permute.xlu0 %1758
      %1761 = vset.pattern.permute.xlu0 2
      %1762 = vperm.xlu0 %1761, %v1095
      %v1763 = vpop.permute.xlu0 %1762
      %1765 = vset.pattern.permute.xlu0 2
      %1766 = vperm.xlu0 %1765, %v1096
      %v1767 = vpop.permute.xlu0 %1766
      %v1769 = vmul.f32 %v1643, %v969
      %v1770 = vmul.f32 %v1647, %v971
      %v1771 = vmul.f32 %v1651, %v973
      %v1772 = vmul.f32 %v1655, %v975
      %v1773 = vmul.f32 %v1659, %v977
      %v1774 = vmul.f32 %v1663, %v979
      %v1775 = vmul.f32 %v1667, %v981
      %v1776 = vmul.f32 %v1671, %v983
      %v1777 = vmul.f32 %v1675, %v985
      %v1778 = vmul.f32 %v1679, %v987
      %v1779 = vmul.f32 %v1683, %v989
      %v1780 = vmul.f32 %v1687, %v991
      %v1781 = vmul.f32 %v1691, %v993
      %v1782 = vmul.f32 %v1695, %v995
      %v1783 = vmul.f32 %v1699, %v997
      %v1784 = vmul.f32 %v1703, %v999
      %v1785 = vmul.f32 %v1707, %v1001
      %v1786 = vmul.f32 %v1711, %v1003
      %v1787 = vmul.f32 %v1715, %v1005
      %v1788 = vmul.f32 %v1719, %v1007
      %v1789 = vmul.f32 %v1723, %v1009
      %v1790 = vmul.f32 %v1727, %v1011
      %v1791 = vmul.f32 %v1731, %v1013
      %v1792 = vmul.f32 %v1735, %v1015
      %v1793 = vmul.f32 %v1739, %v1017
      %v1794 = vmul.f32 %v1743, %v1019
      %v1795 = vmul.f32 %v1747, %v1021
      %v1796 = vmul.f32 %v1751, %v1023
      %v1797 = vmul.f32 %v1755, %v1025
      %v1798 = vmul.f32 %v1759, %v1027
      %v1799 = vmul.f32 %v1763, %v1029
      %v1800 = vmul.f32 %v1767, %v1031
      %1833 = vrot.lane.b32.xlu0 %v1769, 64
      %v1834 = vpop.permute.xlu0 %1833
      %1835 = vrot.lane.b32.xlu0 %v1770, 64
      %v1836 = vpop.permute.xlu0 %1835
      %1837 = vrot.lane.b32.xlu0 %v1771, 64
      %v1838 = vpop.permute.xlu0 %1837
      %1839 = vrot.lane.b32.xlu0 %v1772, 64
      %v1840 = vpop.permute.xlu0 %1839
      %1841 = vrot.lane.b32.xlu0 %v1773, 64
      %v1842 = vpop.permute.xlu0 %1841
      %1843 = vrot.lane.b32.xlu0 %v1774, 64
      %v1844 = vpop.permute.xlu0 %1843
      %1845 = vrot.lane.b32.xlu0 %v1775, 64
      %v1846 = vpop.permute.xlu0 %1845
      %1847 = vrot.lane.b32.xlu0 %v1776, 64
      %v1848 = vpop.permute.xlu0 %1847
      %1849 = vrot.lane.b32.xlu0 %v1777, 64
      %v1850 = vpop.permute.xlu0 %1849
      %1851 = vrot.lane.b32.xlu0 %v1778, 64
      %v1852 = vpop.permute.xlu0 %1851
      %1853 = vrot.lane.b32.xlu0 %v1779, 64
      %v1854 = vpop.permute.xlu0 %1853
      %1855 = vrot.lane.b32.xlu0 %v1780, 64
      %v1856 = vpop.permute.xlu0 %1855
      %1857 = vrot.lane.b32.xlu0 %v1781, 64
      %v1858 = vpop.permute.xlu0 %1857
      %1859 = vrot.lane.b32.xlu0 %v1782, 64
      %v1860 = vpop.permute.xlu0 %1859
      %1861 = vrot.lane.b32.xlu0 %v1783, 64
      %v1862 = vpop.permute.xlu0 %1861
      %1863 = vrot.lane.b32.xlu0 %v1784, 64
      %v1864 = vpop.permute.xlu0 %1863
      %1865 = vrot.lane.b32.xlu0 %v1785, 64
      %v1866 = vpop.permute.xlu0 %1865
      %1867 = vrot.lane.b32.xlu0 %v1786, 64
      %v1868 = vpop.permute.xlu0 %1867
      %1869 = vrot.lane.b32.xlu0 %v1787, 64
      %v1870 = vpop.permute.xlu0 %1869
      %1871 = vrot.lane.b32.xlu0 %v1788, 64
      %v1872 = vpop.permute.xlu0 %1871
      %1873 = vrot.lane.b32.xlu0 %v1789, 64
      %v1874 = vpop.permute.xlu0 %1873
      %1875 = vrot.lane.b32.xlu0 %v1790, 64
      %v1876 = vpop.permute.xlu0 %1875
      %1877 = vrot.lane.b32.xlu0 %v1791, 64
      %v1878 = vpop.permute.xlu0 %1877
      %1879 = vrot.lane.b32.xlu0 %v1792, 64
      %v1880 = vpop.permute.xlu0 %1879
      %1881 = vrot.lane.b32.xlu0 %v1793, 64
      %v1882 = vpop.permute.xlu0 %1881
      %1883 = vrot.lane.b32.xlu0 %v1794, 64
      %v1884 = vpop.permute.xlu0 %1883
      %1885 = vrot.lane.b32.xlu0 %v1795, 64
      %v1886 = vpop.permute.xlu0 %1885
      %1887 = vrot.lane.b32.xlu0 %v1796, 64
      %v1888 = vpop.permute.xlu0 %1887
      %1889 = vrot.lane.b32.xlu0 %v1797, 64
      %v1890 = vpop.permute.xlu0 %1889
      %1891 = vrot.lane.b32.xlu0 %v1798, 64
      %v1892 = vpop.permute.xlu0 %1891
      %1893 = vrot.lane.b32.xlu0 %v1799, 64
      %v1894 = vpop.permute.xlu0 %1893
      %1895 = vrot.lane.b32.xlu0 %v1800, 64
      %v1896 = vpop.permute.xlu0 %1895
      %v1929 = vadd.f32 %v1609, %v1834
      %v1930 = vadd.f32 %v1610, %v1836
      %v1931 = vadd.f32 %v1611, %v1838
      %v1932 = vadd.f32 %v1612, %v1840
      %v1933 = vadd.f32 %v1613, %v1842
      %v1934 = vadd.f32 %v1614, %v1844
      %v1935 = vadd.f32 %v1615, %v1846
      %v1936 = vadd.f32 %v1616, %v1848
      %v1937 = vadd.f32 %v1617, %v1850
      %v1938 = vadd.f32 %v1618, %v1852
      %v1939 = vadd.f32 %v1619, %v1854
      %v1940 = vadd.f32 %v1620, %v1856
      %v1941 = vadd.f32 %v1621, %v1858
      %v1942 = vadd.f32 %v1622, %v1860
      %v1943 = vadd.f32 %v1623, %v1862
      %v1944 = vadd.f32 %v1624, %v1864
      %v1945 = vadd.f32 %v1625, %v1866
      %v1946 = vadd.f32 %v1626, %v1868
      %v1947 = vadd.f32 %v1627, %v1870
      %v1948 = vadd.f32 %v1628, %v1872
      %v1949 = vadd.f32 %v1629, %v1874
      %v1950 = vadd.f32 %v1630, %v1876
      %v1951 = vadd.f32 %v1631, %v1878
      %v1952 = vadd.f32 %v1632, %v1880
      %v1953 = vadd.f32 %v1633, %v1882
      %v1954 = vadd.f32 %v1634, %v1884
      %v1955 = vadd.f32 %v1635, %v1886
      %v1956 = vadd.f32 %v1636, %v1888
      %v1957 = vadd.f32 %v1637, %v1890
      %v1958 = vadd.f32 %v1638, %v1892
      %v1959 = vadd.f32 %v1639, %v1894
      %v1960 = vadd.f32 %v1640, %v1896
      %1961 = vset.pattern.permute.xlu0 3
      %1962 = vperm.xlu0 %1961, %v1065
      %v1963 = vpop.permute.xlu0 %1962
      %1965 = vset.pattern.permute.xlu0 3
      %1966 = vperm.xlu0 %1965, %v1066
      %v1967 = vpop.permute.xlu0 %1966
      %1969 = vset.pattern.permute.xlu0 3
      %1970 = vperm.xlu0 %1969, %v1067
      %v1971 = vpop.permute.xlu0 %1970
      %1973 = vset.pattern.permute.xlu0 3
      %1974 = vperm.xlu0 %1973, %v1068
      %v1975 = vpop.permute.xlu0 %1974
      %1977 = vset.pattern.permute.xlu0 3
      %1978 = vperm.xlu0 %1977, %v1069
      %v1979 = vpop.permute.xlu0 %1978
      %1981 = vset.pattern.permute.xlu0 3
      %1982 = vperm.xlu0 %1981, %v1070
      %v1983 = vpop.permute.xlu0 %1982
      %1985 = vset.pattern.permute.xlu0 3
      %1986 = vperm.xlu0 %1985, %v1071
      %v1987 = vpop.permute.xlu0 %1986
      %1989 = vset.pattern.permute.xlu0 3
      %1990 = vperm.xlu0 %1989, %v1072
      %v1991 = vpop.permute.xlu0 %1990
      %1993 = vset.pattern.permute.xlu0 3
      %1994 = vperm.xlu0 %1993, %v1073
      %v1995 = vpop.permute.xlu0 %1994
      %1997 = vset.pattern.permute.xlu0 3
      %1998 = vperm.xlu0 %1997, %v1074
      %v1999 = vpop.permute.xlu0 %1998
      %2001 = vset.pattern.permute.xlu0 3
      %2002 = vperm.xlu0 %2001, %v1075
      %v2003 = vpop.permute.xlu0 %2002
      %2005 = vset.pattern.permute.xlu0 3
      %2006 = vperm.xlu0 %2005, %v1076
      %v2007 = vpop.permute.xlu0 %2006
      %2009 = vset.pattern.permute.xlu0 3
      %2010 = vperm.xlu0 %2009, %v1077
      %v2011 = vpop.permute.xlu0 %2010
      %2013 = vset.pattern.permute.xlu0 3
      %2014 = vperm.xlu0 %2013, %v1078
      %v2015 = vpop.permute.xlu0 %2014
      %2017 = vset.pattern.permute.xlu0 3
      %2018 = vperm.xlu0 %2017, %v1079
      %v2019 = vpop.permute.xlu0 %2018
      %2021 = vset.pattern.permute.xlu0 3
      %2022 = vperm.xlu0 %2021, %v1080
      %v2023 = vpop.permute.xlu0 %2022
      %2025 = vset.pattern.permute.xlu0 3
      %2026 = vperm.xlu0 %2025, %v1081
      %v2027 = vpop.permute.xlu0 %2026
      %2029 = vset.pattern.permute.xlu0 3
      %2030 = vperm.xlu0 %2029, %v1082
      %v2031 = vpop.permute.xlu0 %2030
      %2033 = vset.pattern.permute.xlu0 3
      %2034 = vperm.xlu0 %2033, %v1083
      %v2035 = vpop.permute.xlu0 %2034
      %2037 = vset.pattern.permute.xlu0 3
      %2038 = vperm.xlu0 %2037, %v1084
      %v2039 = vpop.permute.xlu0 %2038
      %2041 = vset.pattern.permute.xlu0 3
      %2042 = vperm.xlu0 %2041, %v1085
      %v2043 = vpop.permute.xlu0 %2042
      %2045 = vset.pattern.permute.xlu0 3
      %2046 = vperm.xlu0 %2045, %v1086
      %v2047 = vpop.permute.xlu0 %2046
      %2049 = vset.pattern.permute.xlu0 3
      %2050 = vperm.xlu0 %2049, %v1087
      %v2051 = vpop.permute.xlu0 %2050
      %2053 = vset.pattern.permute.xlu0 3
      %2054 = vperm.xlu0 %2053, %v1088
      %v2055 = vpop.permute.xlu0 %2054
      %2057 = vset.pattern.permute.xlu0 3
      %2058 = vperm.xlu0 %2057, %v1089
      %v2059 = vpop.permute.xlu0 %2058
      %2061 = vset.pattern.permute.xlu0 3
      %2062 = vperm.xlu0 %2061, %v1090
      %v2063 = vpop.permute.xlu0 %2062
      %2065 = vset.pattern.permute.xlu0 3
      %2066 = vperm.xlu0 %2065, %v1091
      %v2067 = vpop.permute.xlu0 %2066
      %2069 = vset.pattern.permute.xlu0 3
      %2070 = vperm.xlu0 %2069, %v1092
      %v2071 = vpop.permute.xlu0 %2070
      %2073 = vset.pattern.permute.xlu0 3
      %2074 = vperm.xlu0 %2073, %v1093
      %v2075 = vpop.permute.xlu0 %2074
      %2077 = vset.pattern.permute.xlu0 3
      %2078 = vperm.xlu0 %2077, %v1094
      %v2079 = vpop.permute.xlu0 %2078
      %2081 = vset.pattern.permute.xlu0 3
      %2082 = vperm.xlu0 %2081, %v1095
      %v2083 = vpop.permute.xlu0 %2082
      %2085 = vset.pattern.permute.xlu0 3
      %2086 = vperm.xlu0 %2085, %v1096
      %v2087 = vpop.permute.xlu0 %2086
      %v2089 = vmul.f32 %v1963, %v969
      %v2090 = vmul.f32 %v1967, %v971
      %v2091 = vmul.f32 %v1971, %v973
      %v2092 = vmul.f32 %v1975, %v975
      %v2093 = vmul.f32 %v1979, %v977
      %v2094 = vmul.f32 %v1983, %v979
      %v2095 = vmul.f32 %v1987, %v981
      %v2096 = vmul.f32 %v1991, %v983
      %v2097 = vmul.f32 %v1995, %v985
      %v2098 = vmul.f32 %v1999, %v987
      %v2099 = vmul.f32 %v2003, %v989
      %v2100 = vmul.f32 %v2007, %v991
      %v2101 = vmul.f32 %v2011, %v993
      %v2102 = vmul.f32 %v2015, %v995
      %v2103 = vmul.f32 %v2019, %v997
      %v2104 = vmul.f32 %v2023, %v999
      %v2105 = vmul.f32 %v2027, %v1001
      %v2106 = vmul.f32 %v2031, %v1003
      %v2107 = vmul.f32 %v2035, %v1005
      %v2108 = vmul.f32 %v2039, %v1007
      %v2109 = vmul.f32 %v2043, %v1009
      %v2110 = vmul.f32 %v2047, %v1011
      %v2111 = vmul.f32 %v2051, %v1013
      %v2112 = vmul.f32 %v2055, %v1015
      %v2113 = vmul.f32 %v2059, %v1017
      %v2114 = vmul.f32 %v2063, %v1019
      %v2115 = vmul.f32 %v2067, %v1021
      %v2116 = vmul.f32 %v2071, %v1023
      %v2117 = vmul.f32 %v2075, %v1025
      %v2118 = vmul.f32 %v2079, %v1027
      %v2119 = vmul.f32 %v2083, %v1029
      %v2120 = vmul.f32 %v2087, %v1031
      %2153 = vrot.lane.b32.xlu0 %v2089, 32
      %v2154 = vpop.permute.xlu0 %2153
      %2155 = vrot.lane.b32.xlu0 %v2090, 32
      %v2156 = vpop.permute.xlu0 %2155
      %2157 = vrot.lane.b32.xlu0 %v2091, 32
      %v2158 = vpop.permute.xlu0 %2157
      %2159 = vrot.lane.b32.xlu0 %v2092, 32
      %v2160 = vpop.permute.xlu0 %2159
      %2161 = vrot.lane.b32.xlu0 %v2093, 32
      %v2162 = vpop.permute.xlu0 %2161
      %2163 = vrot.lane.b32.xlu0 %v2094, 32
      %v2164 = vpop.permute.xlu0 %2163
      %2165 = vrot.lane.b32.xlu0 %v2095, 32
      %v2166 = vpop.permute.xlu0 %2165
      %2167 = vrot.lane.b32.xlu0 %v2096, 32
      %v2168 = vpop.permute.xlu0 %2167
      %2169 = vrot.lane.b32.xlu0 %v2097, 32
      %v2170 = vpop.permute.xlu0 %2169
      %2171 = vrot.lane.b32.xlu0 %v2098, 32
      %v2172 = vpop.permute.xlu0 %2171
      %2173 = vrot.lane.b32.xlu0 %v2099, 32
      %v2174 = vpop.permute.xlu0 %2173
      %2175 = vrot.lane.b32.xlu0 %v2100, 32
      %v2176 = vpop.permute.xlu0 %2175
      %2177 = vrot.lane.b32.xlu0 %v2101, 32
      %v2178 = vpop.permute.xlu0 %2177
      %2179 = vrot.lane.b32.xlu0 %v2102, 32
      %v2180 = vpop.permute.xlu0 %2179
      %2181 = vrot.lane.b32.xlu0 %v2103, 32
      %v2182 = vpop.permute.xlu0 %2181
      %2183 = vrot.lane.b32.xlu0 %v2104, 32
      %v2184 = vpop.permute.xlu0 %2183
      %2185 = vrot.lane.b32.xlu0 %v2105, 32
      %v2186 = vpop.permute.xlu0 %2185
      %2187 = vrot.lane.b32.xlu0 %v2106, 32
      %v2188 = vpop.permute.xlu0 %2187
      %2189 = vrot.lane.b32.xlu0 %v2107, 32
      %v2190 = vpop.permute.xlu0 %2189
      %2191 = vrot.lane.b32.xlu0 %v2108, 32
      %v2192 = vpop.permute.xlu0 %2191
      %2193 = vrot.lane.b32.xlu0 %v2109, 32
      %v2194 = vpop.permute.xlu0 %2193
      %2195 = vrot.lane.b32.xlu0 %v2110, 32
      %v2196 = vpop.permute.xlu0 %2195
      %2197 = vrot.lane.b32.xlu0 %v2111, 32
      %v2198 = vpop.permute.xlu0 %2197
      %2199 = vrot.lane.b32.xlu0 %v2112, 32
      %v2200 = vpop.permute.xlu0 %2199
      %2201 = vrot.lane.b32.xlu0 %v2113, 32
      %v2202 = vpop.permute.xlu0 %2201
      %2203 = vrot.lane.b32.xlu0 %v2114, 32
      %v2204 = vpop.permute.xlu0 %2203
      %2205 = vrot.lane.b32.xlu0 %v2115, 32
      %v2206 = vpop.permute.xlu0 %2205
      %2207 = vrot.lane.b32.xlu0 %v2116, 32
      %v2208 = vpop.permute.xlu0 %2207
      %2209 = vrot.lane.b32.xlu0 %v2117, 32
      %v2210 = vpop.permute.xlu0 %2209
      %2211 = vrot.lane.b32.xlu0 %v2118, 32
      %v2212 = vpop.permute.xlu0 %2211
      %2213 = vrot.lane.b32.xlu0 %v2119, 32
      %v2214 = vpop.permute.xlu0 %2213
      %2215 = vrot.lane.b32.xlu0 %v2120, 32
      %v2216 = vpop.permute.xlu0 %2215
      %v2249 = vadd.f32 %v1929, %v2154
      %v2250 = vadd.f32 %v1930, %v2156
      %v2251 = vadd.f32 %v1931, %v2158
      %v2252 = vadd.f32 %v1932, %v2160
      %v2253 = vadd.f32 %v1933, %v2162
      %v2254 = vadd.f32 %v1934, %v2164
      %v2255 = vadd.f32 %v1935, %v2166
      %v2256 = vadd.f32 %v1936, %v2168
      %v2257 = vadd.f32 %v1937, %v2170
      %v2258 = vadd.f32 %v1938, %v2172
      %v2259 = vadd.f32 %v1939, %v2174
      %v2260 = vadd.f32 %v1940, %v2176
      %v2261 = vadd.f32 %v1941, %v2178
      %v2262 = vadd.f32 %v1942, %v2180
      %v2263 = vadd.f32 %v1943, %v2182
      %v2264 = vadd.f32 %v1944, %v2184
      %v2265 = vadd.f32 %v1945, %v2186
      %v2266 = vadd.f32 %v1946, %v2188
      %v2267 = vadd.f32 %v1947, %v2190
      %v2268 = vadd.f32 %v1948, %v2192
      %v2269 = vadd.f32 %v1949, %v2194
      %v2270 = vadd.f32 %v1950, %v2196
      %v2271 = vadd.f32 %v1951, %v2198
      %v2272 = vadd.f32 %v1952, %v2200
      %v2273 = vadd.f32 %v1953, %v2202
      %v2274 = vadd.f32 %v1954, %v2204
      %v2275 = vadd.f32 %v1955, %v2206
      %v2276 = vadd.f32 %v1956, %v2208
      %v2277 = vadd.f32 %v1957, %v2210
      %v2278 = vadd.f32 %v1958, %v2212
      %v2279 = vadd.f32 %v1959, %v2214
      %v2280 = vadd.f32 %v1960, %v2216
      %2281 = vset.pattern.permute.xlu0 4
      %2282 = vperm.xlu0 %2281, %v1065
      %v2283 = vpop.permute.xlu0 %2282
      %2285 = vset.pattern.permute.xlu0 4
      %2286 = vperm.xlu0 %2285, %v1066
      %v2287 = vpop.permute.xlu0 %2286
      %2289 = vset.pattern.permute.xlu0 4
      %2290 = vperm.xlu0 %2289, %v1067
      %v2291 = vpop.permute.xlu0 %2290
      %2293 = vset.pattern.permute.xlu0 4
      %2294 = vperm.xlu0 %2293, %v1068
      %v2295 = vpop.permute.xlu0 %2294
      %2297 = vset.pattern.permute.xlu0 4
      %2298 = vperm.xlu0 %2297, %v1069
      %v2299 = vpop.permute.xlu0 %2298
      %2301 = vset.pattern.permute.xlu0 4
      %2302 = vperm.xlu0 %2301, %v1070
      %v2303 = vpop.permute.xlu0 %2302
      %2305 = vset.pattern.permute.xlu0 4
      %2306 = vperm.xlu0 %2305, %v1071
      %v2307 = vpop.permute.xlu0 %2306
      %2309 = vset.pattern.permute.xlu0 4
      %2310 = vperm.xlu0 %2309, %v1072
      %v2311 = vpop.permute.xlu0 %2310
      %2313 = vset.pattern.permute.xlu0 4
      %2314 = vperm.xlu0 %2313, %v1073
      %v2315 = vpop.permute.xlu0 %2314
      %2317 = vset.pattern.permute.xlu0 4
      %2318 = vperm.xlu0 %2317, %v1074
      %v2319 = vpop.permute.xlu0 %2318
      %2321 = vset.pattern.permute.xlu0 4
      %2322 = vperm.xlu0 %2321, %v1075
      %v2323 = vpop.permute.xlu0 %2322
      %2325 = vset.pattern.permute.xlu0 4
      %2326 = vperm.xlu0 %2325, %v1076
      %v2327 = vpop.permute.xlu0 %2326
      %2329 = vset.pattern.permute.xlu0 4
      %2330 = vperm.xlu0 %2329, %v1077
      %v2331 = vpop.permute.xlu0 %2330
      %2333 = vset.pattern.permute.xlu0 4
      %2334 = vperm.xlu0 %2333, %v1078
      %v2335 = vpop.permute.xlu0 %2334
      %2337 = vset.pattern.permute.xlu0 4
      %2338 = vperm.xlu0 %2337, %v1079
      %v2339 = vpop.permute.xlu0 %2338
      %2341 = vset.pattern.permute.xlu0 4
      %2342 = vperm.xlu0 %2341, %v1080
      %v2343 = vpop.permute.xlu0 %2342
      %2345 = vset.pattern.permute.xlu0 4
      %2346 = vperm.xlu0 %2345, %v1081
      %v2347 = vpop.permute.xlu0 %2346
      %2349 = vset.pattern.permute.xlu0 4
      %2350 = vperm.xlu0 %2349, %v1082
      %v2351 = vpop.permute.xlu0 %2350
      %2353 = vset.pattern.permute.xlu0 4
      %2354 = vperm.xlu0 %2353, %v1083
      %v2355 = vpop.permute.xlu0 %2354
      %2357 = vset.pattern.permute.xlu0 4
      %2358 = vperm.xlu0 %2357, %v1084
      %v2359 = vpop.permute.xlu0 %2358
      %2361 = vset.pattern.permute.xlu0 4
      %2362 = vperm.xlu0 %2361, %v1085
      %v2363 = vpop.permute.xlu0 %2362
      %2365 = vset.pattern.permute.xlu0 4
      %2366 = vperm.xlu0 %2365, %v1086
      %v2367 = vpop.permute.xlu0 %2366
      %2369 = vset.pattern.permute.xlu0 4
      %2370 = vperm.xlu0 %2369, %v1087
      %v2371 = vpop.permute.xlu0 %2370
      %2373 = vset.pattern.permute.xlu0 4
      %2374 = vperm.xlu0 %2373, %v1088
      %v2375 = vpop.permute.xlu0 %2374
      %2377 = vset.pattern.permute.xlu0 4
      %2378 = vperm.xlu0 %2377, %v1089
      %v2379 = vpop.permute.xlu0 %2378
      %2381 = vset.pattern.permute.xlu0 4
      %2382 = vperm.xlu0 %2381, %v1090
      %v2383 = vpop.permute.xlu0 %2382
      %2385 = vset.pattern.permute.xlu0 4
      %2386 = vperm.xlu0 %2385, %v1091
      %v2387 = vpop.permute.xlu0 %2386
      %2389 = vset.pattern.permute.xlu0 4
      %2390 = vperm.xlu0 %2389, %v1092
      %v2391 = vpop.permute.xlu0 %2390
      %2393 = vset.pattern.permute.xlu0 4
      %2394 = vperm.xlu0 %2393, %v1093
      %v2395 = vpop.permute.xlu0 %2394
      %2397 = vset.pattern.permute.xlu0 4
      %2398 = vperm.xlu0 %2397, %v1094
      %v2399 = vpop.permute.xlu0 %2398
      %2401 = vset.pattern.permute.xlu0 4
      %2402 = vperm.xlu0 %2401, %v1095
      %v2403 = vpop.permute.xlu0 %2402
      %2405 = vset.pattern.permute.xlu0 4
      %2406 = vperm.xlu0 %2405, %v1096
      %v2407 = vpop.permute.xlu0 %2406
      %v2409 = vmul.f32 %v2283, %v970
      %v2410 = vmul.f32 %v2287, %v972
      %v2411 = vmul.f32 %v2291, %v974
      %v2412 = vmul.f32 %v2295, %v976
      %v2413 = vmul.f32 %v2299, %v978
      %v2414 = vmul.f32 %v2303, %v980
      %v2415 = vmul.f32 %v2307, %v982
      %v2416 = vmul.f32 %v2311, %v984
      %v2417 = vmul.f32 %v2315, %v986
      %v2418 = vmul.f32 %v2319, %v988
      %v2419 = vmul.f32 %v2323, %v990
      %v2420 = vmul.f32 %v2327, %v992
      %v2421 = vmul.f32 %v2331, %v994
      %v2422 = vmul.f32 %v2335, %v996
      %v2423 = vmul.f32 %v2339, %v998
      %v2424 = vmul.f32 %v2343, %v1000
      %v2425 = vmul.f32 %v2347, %v1002
      %v2426 = vmul.f32 %v2351, %v1004
      %v2427 = vmul.f32 %v2355, %v1006
      %v2428 = vmul.f32 %v2359, %v1008
      %v2429 = vmul.f32 %v2363, %v1010
      %v2430 = vmul.f32 %v2367, %v1012
      %v2431 = vmul.f32 %v2371, %v1014
      %v2432 = vmul.f32 %v2375, %v1016
      %v2433 = vmul.f32 %v2379, %v1018
      %v2434 = vmul.f32 %v2383, %v1020
      %v2435 = vmul.f32 %v2387, %v1022
      %v2436 = vmul.f32 %v2391, %v1024
      %v2437 = vmul.f32 %v2395, %v1026
      %v2438 = vmul.f32 %v2399, %v1028
      %v2439 = vmul.f32 %v2403, %v1030
      %v2440 = vmul.f32 %v2407, %v1032
      %v2441 = vadd.f32 %v2249, %v2409
      %v2442 = vadd.f32 %v2250, %v2410
      %v2443 = vadd.f32 %v2251, %v2411
      %v2444 = vadd.f32 %v2252, %v2412
      %v2445 = vadd.f32 %v2253, %v2413
      %v2446 = vadd.f32 %v2254, %v2414
      %v2447 = vadd.f32 %v2255, %v2415
      %v2448 = vadd.f32 %v2256, %v2416
      %v2449 = vadd.f32 %v2257, %v2417
      %v2450 = vadd.f32 %v2258, %v2418
      %v2451 = vadd.f32 %v2259, %v2419
      %v2452 = vadd.f32 %v2260, %v2420
      %v2453 = vadd.f32 %v2261, %v2421
      %v2454 = vadd.f32 %v2262, %v2422
      %v2455 = vadd.f32 %v2263, %v2423
      %v2456 = vadd.f32 %v2264, %v2424
      %v2457 = vadd.f32 %v2265, %v2425
      %v2458 = vadd.f32 %v2266, %v2426
      %v2459 = vadd.f32 %v2267, %v2427
      %v2460 = vadd.f32 %v2268, %v2428
      %v2461 = vadd.f32 %v2269, %v2429
      %v2462 = vadd.f32 %v2270, %v2430
      %v2463 = vadd.f32 %v2271, %v2431
      %v2464 = vadd.f32 %v2272, %v2432
      %v2465 = vadd.f32 %v2273, %v2433
      %v2466 = vadd.f32 %v2274, %v2434
      %v2467 = vadd.f32 %v2275, %v2435
      %v2468 = vadd.f32 %v2276, %v2436
      %v2469 = vadd.f32 %v2277, %v2437
      %v2470 = vadd.f32 %v2278, %v2438
      %v2471 = vadd.f32 %v2279, %v2439
      %v2472 = vadd.f32 %v2280, %v2440
      %2473 = vset.pattern.permute.xlu0 5
      %2474 = vperm.xlu0 %2473, %v1065
      %v2475 = vpop.permute.xlu0 %2474
      %2477 = vset.pattern.permute.xlu0 5
      %2478 = vperm.xlu0 %2477, %v1066
      %v2479 = vpop.permute.xlu0 %2478
      %2481 = vset.pattern.permute.xlu0 5
      %2482 = vperm.xlu0 %2481, %v1067
      %v2483 = vpop.permute.xlu0 %2482
      %2485 = vset.pattern.permute.xlu0 5
      %2486 = vperm.xlu0 %2485, %v1068
      %v2487 = vpop.permute.xlu0 %2486
      %2489 = vset.pattern.permute.xlu0 5
      %2490 = vperm.xlu0 %2489, %v1069
      %v2491 = vpop.permute.xlu0 %2490
      %2493 = vset.pattern.permute.xlu0 5
      %2494 = vperm.xlu0 %2493, %v1070
      %v2495 = vpop.permute.xlu0 %2494
      %2497 = vset.pattern.permute.xlu0 5
      %2498 = vperm.xlu0 %2497, %v1071
      %v2499 = vpop.permute.xlu0 %2498
      %2501 = vset.pattern.permute.xlu0 5
      %2502 = vperm.xlu0 %2501, %v1072
      %v2503 = vpop.permute.xlu0 %2502
      %2505 = vset.pattern.permute.xlu0 5
      %2506 = vperm.xlu0 %2505, %v1073
      %v2507 = vpop.permute.xlu0 %2506
      %2509 = vset.pattern.permute.xlu0 5
      %2510 = vperm.xlu0 %2509, %v1074
      %v2511 = vpop.permute.xlu0 %2510
      %2513 = vset.pattern.permute.xlu0 5
      %2514 = vperm.xlu0 %2513, %v1075
      %v2515 = vpop.permute.xlu0 %2514
      %2517 = vset.pattern.permute.xlu0 5
      %2518 = vperm.xlu0 %2517, %v1076
      %v2519 = vpop.permute.xlu0 %2518
      %2521 = vset.pattern.permute.xlu0 5
      %2522 = vperm.xlu0 %2521, %v1077
      %v2523 = vpop.permute.xlu0 %2522
      %2525 = vset.pattern.permute.xlu0 5
      %2526 = vperm.xlu0 %2525, %v1078
      %v2527 = vpop.permute.xlu0 %2526
      %2529 = vset.pattern.permute.xlu0 5
      %2530 = vperm.xlu0 %2529, %v1079
      %v2531 = vpop.permute.xlu0 %2530
      %2533 = vset.pattern.permute.xlu0 5
      %2534 = vperm.xlu0 %2533, %v1080
      %v2535 = vpop.permute.xlu0 %2534
      %2537 = vset.pattern.permute.xlu0 5
      %2538 = vperm.xlu0 %2537, %v1081
      %v2539 = vpop.permute.xlu0 %2538
      %2541 = vset.pattern.permute.xlu0 5
      %2542 = vperm.xlu0 %2541, %v1082
      %v2543 = vpop.permute.xlu0 %2542
      %2545 = vset.pattern.permute.xlu0 5
      %2546 = vperm.xlu0 %2545, %v1083
      %v2547 = vpop.permute.xlu0 %2546
      %2549 = vset.pattern.permute.xlu0 5
      %2550 = vperm.xlu0 %2549, %v1084
      %v2551 = vpop.permute.xlu0 %2550
      %2553 = vset.pattern.permute.xlu0 5
      %2554 = vperm.xlu0 %2553, %v1085
      %v2555 = vpop.permute.xlu0 %2554
      %2557 = vset.pattern.permute.xlu0 5
      %2558 = vperm.xlu0 %2557, %v1086
      %v2559 = vpop.permute.xlu0 %2558
      %2561 = vset.pattern.permute.xlu0 5
      %2562 = vperm.xlu0 %2561, %v1087
      %v2563 = vpop.permute.xlu0 %2562
      %2565 = vset.pattern.permute.xlu0 5
      %2566 = vperm.xlu0 %2565, %v1088
      %v2567 = vpop.permute.xlu0 %2566
      %2569 = vset.pattern.permute.xlu0 5
      %2570 = vperm.xlu0 %2569, %v1089
      %v2571 = vpop.permute.xlu0 %2570
      %2573 = vset.pattern.permute.xlu0 5
      %2574 = vperm.xlu0 %2573, %v1090
      %v2575 = vpop.permute.xlu0 %2574
      %2577 = vset.pattern.permute.xlu0 5
      %2578 = vperm.xlu0 %2577, %v1091
      %v2579 = vpop.permute.xlu0 %2578
      %2581 = vset.pattern.permute.xlu0 5
      %2582 = vperm.xlu0 %2581, %v1092
      %v2583 = vpop.permute.xlu0 %2582
      %2585 = vset.pattern.permute.xlu0 5
      %2586 = vperm.xlu0 %2585, %v1093
      %v2587 = vpop.permute.xlu0 %2586
      %2589 = vset.pattern.permute.xlu0 5
      %2590 = vperm.xlu0 %2589, %v1094
      %v2591 = vpop.permute.xlu0 %2590
      %2593 = vset.pattern.permute.xlu0 5
      %2594 = vperm.xlu0 %2593, %v1095
      %v2595 = vpop.permute.xlu0 %2594
      %2597 = vset.pattern.permute.xlu0 5
      %2598 = vperm.xlu0 %2597, %v1096
      %v2599 = vpop.permute.xlu0 %2598
      %v2601 = vmul.f32 %v2475, %v970
      %v2602 = vmul.f32 %v2479, %v972
      %v2603 = vmul.f32 %v2483, %v974
      %v2604 = vmul.f32 %v2487, %v976
      %v2605 = vmul.f32 %v2491, %v978
      %v2606 = vmul.f32 %v2495, %v980
      %v2607 = vmul.f32 %v2499, %v982
      %v2608 = vmul.f32 %v2503, %v984
      %v2609 = vmul.f32 %v2507, %v986
      %v2610 = vmul.f32 %v2511, %v988
      %v2611 = vmul.f32 %v2515, %v990
      %v2612 = vmul.f32 %v2519, %v992
      %v2613 = vmul.f32 %v2523, %v994
      %v2614 = vmul.f32 %v2527, %v996
      %v2615 = vmul.f32 %v2531, %v998
      %v2616 = vmul.f32 %v2535, %v1000
      %v2617 = vmul.f32 %v2539, %v1002
      %v2618 = vmul.f32 %v2543, %v1004
      %v2619 = vmul.f32 %v2547, %v1006
      %v2620 = vmul.f32 %v2551, %v1008
      %v2621 = vmul.f32 %v2555, %v1010
      %v2622 = vmul.f32 %v2559, %v1012
      %v2623 = vmul.f32 %v2563, %v1014
      %v2624 = vmul.f32 %v2567, %v1016
      %v2625 = vmul.f32 %v2571, %v1018
      %v2626 = vmul.f32 %v2575, %v1020
      %v2627 = vmul.f32 %v2579, %v1022
      %v2628 = vmul.f32 %v2583, %v1024
      %v2629 = vmul.f32 %v2587, %v1026
      %v2630 = vmul.f32 %v2591, %v1028
      %v2631 = vmul.f32 %v2595, %v1030
      %v2632 = vmul.f32 %v2599, %v1032
      %2665 = vrot.lane.b32.xlu0 %v2601, 96
      %v2666 = vpop.permute.xlu0 %2665
      %2667 = vrot.lane.b32.xlu0 %v2602, 96
      %v2668 = vpop.permute.xlu0 %2667
      %2669 = vrot.lane.b32.xlu0 %v2603, 96
      %v2670 = vpop.permute.xlu0 %2669
      %2671 = vrot.lane.b32.xlu0 %v2604, 96
      %v2672 = vpop.permute.xlu0 %2671
      %2673 = vrot.lane.b32.xlu0 %v2605, 96
      %v2674 = vpop.permute.xlu0 %2673
      %2675 = vrot.lane.b32.xlu0 %v2606, 96
      %v2676 = vpop.permute.xlu0 %2675
      %2677 = vrot.lane.b32.xlu0 %v2607, 96
      %v2678 = vpop.permute.xlu0 %2677
      %2679 = vrot.lane.b32.xlu0 %v2608, 96
      %v2680 = vpop.permute.xlu0 %2679
      %2681 = vrot.lane.b32.xlu0 %v2609, 96
      %v2682 = vpop.permute.xlu0 %2681
      %2683 = vrot.lane.b32.xlu0 %v2610, 96
      %v2684 = vpop.permute.xlu0 %2683
      %2685 = vrot.lane.b32.xlu0 %v2611, 96
      %v2686 = vpop.permute.xlu0 %2685
      %2687 = vrot.lane.b32.xlu0 %v2612, 96
      %v2688 = vpop.permute.xlu0 %2687
      %2689 = vrot.lane.b32.xlu0 %v2613, 96
      %v2690 = vpop.permute.xlu0 %2689
      %2691 = vrot.lane.b32.xlu0 %v2614, 96
      %v2692 = vpop.permute.xlu0 %2691
      %2693 = vrot.lane.b32.xlu0 %v2615, 96
      %v2694 = vpop.permute.xlu0 %2693
      %2695 = vrot.lane.b32.xlu0 %v2616, 96
      %v2696 = vpop.permute.xlu0 %2695
      %2697 = vrot.lane.b32.xlu0 %v2617, 96
      %v2698 = vpop.permute.xlu0 %2697
      %2699 = vrot.lane.b32.xlu0 %v2618, 96
      %v2700 = vpop.permute.xlu0 %2699
      %2701 = vrot.lane.b32.xlu0 %v2619, 96
      %v2702 = vpop.permute.xlu0 %2701
      %2703 = vrot.lane.b32.xlu0 %v2620, 96
      %v2704 = vpop.permute.xlu0 %2703
      %2705 = vrot.lane.b32.xlu0 %v2621, 96
      %v2706 = vpop.permute.xlu0 %2705
      %2707 = vrot.lane.b32.xlu0 %v2622, 96
      %v2708 = vpop.permute.xlu0 %2707
      %2709 = vrot.lane.b32.xlu0 %v2623, 96
      %v2710 = vpop.permute.xlu0 %2709
      %2711 = vrot.lane.b32.xlu0 %v2624, 96
      %v2712 = vpop.permute.xlu0 %2711
      %2713 = vrot.lane.b32.xlu0 %v2625, 96
      %v2714 = vpop.permute.xlu0 %2713
      %2715 = vrot.lane.b32.xlu0 %v2626, 96
      %v2716 = vpop.permute.xlu0 %2715
      %2717 = vrot.lane.b32.xlu0 %v2627, 96
      %v2718 = vpop.permute.xlu0 %2717
      %2719 = vrot.lane.b32.xlu0 %v2628, 96
      %v2720 = vpop.permute.xlu0 %2719
      %2721 = vrot.lane.b32.xlu0 %v2629, 96
      %v2722 = vpop.permute.xlu0 %2721
      %2723 = vrot.lane.b32.xlu0 %v2630, 96
      %v2724 = vpop.permute.xlu0 %2723
      %2725 = vrot.lane.b32.xlu0 %v2631, 96
      %v2726 = vpop.permute.xlu0 %2725
      %2727 = vrot.lane.b32.xlu0 %v2632, 96
      %v2728 = vpop.permute.xlu0 %2727
      %v2761 = vadd.f32 %v2441, %v2666
      %v2762 = vadd.f32 %v2442, %v2668
      %v2763 = vadd.f32 %v2443, %v2670
      %v2764 = vadd.f32 %v2444, %v2672
      %v2765 = vadd.f32 %v2445, %v2674
      %v2766 = vadd.f32 %v2446, %v2676
      %v2767 = vadd.f32 %v2447, %v2678
      %v2768 = vadd.f32 %v2448, %v2680
      %v2769 = vadd.f32 %v2449, %v2682
      %v2770 = vadd.f32 %v2450, %v2684
      %v2771 = vadd.f32 %v2451, %v2686
      %v2772 = vadd.f32 %v2452, %v2688
      %v2773 = vadd.f32 %v2453, %v2690
      %v2774 = vadd.f32 %v2454, %v2692
      %v2775 = vadd.f32 %v2455, %v2694
      %v2776 = vadd.f32 %v2456, %v2696
      %v2777 = vadd.f32 %v2457, %v2698
      %v2778 = vadd.f32 %v2458, %v2700
      %v2779 = vadd.f32 %v2459, %v2702
      %v2780 = vadd.f32 %v2460, %v2704
      %v2781 = vadd.f32 %v2461, %v2706
      %v2782 = vadd.f32 %v2462, %v2708
      %v2783 = vadd.f32 %v2463, %v2710
      %v2784 = vadd.f32 %v2464, %v2712
      %v2785 = vadd.f32 %v2465, %v2714
      %v2786 = vadd.f32 %v2466, %v2716
      %v2787 = vadd.f32 %v2467, %v2718
      %v2788 = vadd.f32 %v2468, %v2720
      %v2789 = vadd.f32 %v2469, %v2722
      %v2790 = vadd.f32 %v2470, %v2724
      %v2791 = vadd.f32 %v2471, %v2726
      %v2792 = vadd.f32 %v2472, %v2728
      %2793 = vset.pattern.permute.xlu0 6
      %2794 = vperm.xlu0 %2793, %v1065
      %v2795 = vpop.permute.xlu0 %2794
      %2797 = vset.pattern.permute.xlu0 6
      %2798 = vperm.xlu0 %2797, %v1066
      %v2799 = vpop.permute.xlu0 %2798
      %2801 = vset.pattern.permute.xlu0 6
      %2802 = vperm.xlu0 %2801, %v1067
      %v2803 = vpop.permute.xlu0 %2802
      %2805 = vset.pattern.permute.xlu0 6
      %2806 = vperm.xlu0 %2805, %v1068
      %v2807 = vpop.permute.xlu0 %2806
      %2809 = vset.pattern.permute.xlu0 6
      %2810 = vperm.xlu0 %2809, %v1069
      %v2811 = vpop.permute.xlu0 %2810
      %2813 = vset.pattern.permute.xlu0 6
      %2814 = vperm.xlu0 %2813, %v1070
      %v2815 = vpop.permute.xlu0 %2814
      %2817 = vset.pattern.permute.xlu0 6
      %2818 = vperm.xlu0 %2817, %v1071
      %v2819 = vpop.permute.xlu0 %2818
      %2821 = vset.pattern.permute.xlu0 6
      %2822 = vperm.xlu0 %2821, %v1072
      %v2823 = vpop.permute.xlu0 %2822
      %2825 = vset.pattern.permute.xlu0 6
      %2826 = vperm.xlu0 %2825, %v1073
      %v2827 = vpop.permute.xlu0 %2826
      %2829 = vset.pattern.permute.xlu0 6
      %2830 = vperm.xlu0 %2829, %v1074
      %v2831 = vpop.permute.xlu0 %2830
      %2833 = vset.pattern.permute.xlu0 6
      %2834 = vperm.xlu0 %2833, %v1075
      %v2835 = vpop.permute.xlu0 %2834
      %2837 = vset.pattern.permute.xlu0 6
      %2838 = vperm.xlu0 %2837, %v1076
      %v2839 = vpop.permute.xlu0 %2838
      %2841 = vset.pattern.permute.xlu0 6
      %2842 = vperm.xlu0 %2841, %v1077
      %v2843 = vpop.permute.xlu0 %2842
      %2845 = vset.pattern.permute.xlu0 6
      %2846 = vperm.xlu0 %2845, %v1078
      %v2847 = vpop.permute.xlu0 %2846
      %2849 = vset.pattern.permute.xlu0 6
      %2850 = vperm.xlu0 %2849, %v1079
      %v2851 = vpop.permute.xlu0 %2850
      %2853 = vset.pattern.permute.xlu0 6
      %2854 = vperm.xlu0 %2853, %v1080
      %v2855 = vpop.permute.xlu0 %2854
      %2857 = vset.pattern.permute.xlu0 6
      %2858 = vperm.xlu0 %2857, %v1081
      %v2859 = vpop.permute.xlu0 %2858
      %2861 = vset.pattern.permute.xlu0 6
      %2862 = vperm.xlu0 %2861, %v1082
      %v2863 = vpop.permute.xlu0 %2862
      %2865 = vset.pattern.permute.xlu0 6
      %2866 = vperm.xlu0 %2865, %v1083
      %v2867 = vpop.permute.xlu0 %2866
      %2869 = vset.pattern.permute.xlu0 6
      %2870 = vperm.xlu0 %2869, %v1084
      %v2871 = vpop.permute.xlu0 %2870
      %2873 = vset.pattern.permute.xlu0 6
      %2874 = vperm.xlu0 %2873, %v1085
      %v2875 = vpop.permute.xlu0 %2874
      %2877 = vset.pattern.permute.xlu0 6
      %2878 = vperm.xlu0 %2877, %v1086
      %v2879 = vpop.permute.xlu0 %2878
      %2881 = vset.pattern.permute.xlu0 6
      %2882 = vperm.xlu0 %2881, %v1087
      %v2883 = vpop.permute.xlu0 %2882
      %2885 = vset.pattern.permute.xlu0 6
      %2886 = vperm.xlu0 %2885, %v1088
      %v2887 = vpop.permute.xlu0 %2886
      %2889 = vset.pattern.permute.xlu0 6
      %2890 = vperm.xlu0 %2889, %v1089
      %v2891 = vpop.permute.xlu0 %2890
      %2893 = vset.pattern.permute.xlu0 6
      %2894 = vperm.xlu0 %2893, %v1090
      %v2895 = vpop.permute.xlu0 %2894
      %2897 = vset.pattern.permute.xlu0 6
      %2898 = vperm.xlu0 %2897, %v1091
      %v2899 = vpop.permute.xlu0 %2898
      %2901 = vset.pattern.permute.xlu0 6
      %2902 = vperm.xlu0 %2901, %v1092
      %v2903 = vpop.permute.xlu0 %2902
      %2905 = vset.pattern.permute.xlu0 6
      %2906 = vperm.xlu0 %2905, %v1093
      %v2907 = vpop.permute.xlu0 %2906
      %2909 = vset.pattern.permute.xlu0 6
      %2910 = vperm.xlu0 %2909, %v1094
      %v2911 = vpop.permute.xlu0 %2910
      %2913 = vset.pattern.permute.xlu0 6
      %2914 = vperm.xlu0 %2913, %v1095
      %v2915 = vpop.permute.xlu0 %2914
      %2917 = vset.pattern.permute.xlu0 6
      %2918 = vperm.xlu0 %2917, %v1096
      %v2919 = vpop.permute.xlu0 %2918
      %v2921 = vmul.f32 %v2795, %v970
      %v2922 = vmul.f32 %v2799, %v972
      %v2923 = vmul.f32 %v2803, %v974
      %v2924 = vmul.f32 %v2807, %v976
      %v2925 = vmul.f32 %v2811, %v978
      %v2926 = vmul.f32 %v2815, %v980
      %v2927 = vmul.f32 %v2819, %v982
      %v2928 = vmul.f32 %v2823, %v984
      %v2929 = vmul.f32 %v2827, %v986
      %v2930 = vmul.f32 %v2831, %v988
      %v2931 = vmul.f32 %v2835, %v990
      %v2932 = vmul.f32 %v2839, %v992
      %v2933 = vmul.f32 %v2843, %v994
      %v2934 = vmul.f32 %v2847, %v996
      %v2935 = vmul.f32 %v2851, %v998
      %v2936 = vmul.f32 %v2855, %v1000
      %v2937 = vmul.f32 %v2859, %v1002
      %v2938 = vmul.f32 %v2863, %v1004
      %v2939 = vmul.f32 %v2867, %v1006
      %v2940 = vmul.f32 %v2871, %v1008
      %v2941 = vmul.f32 %v2875, %v1010
      %v2942 = vmul.f32 %v2879, %v1012
      %v2943 = vmul.f32 %v2883, %v1014
      %v2944 = vmul.f32 %v2887, %v1016
      %v2945 = vmul.f32 %v2891, %v1018
      %v2946 = vmul.f32 %v2895, %v1020
      %v2947 = vmul.f32 %v2899, %v1022
      %v2948 = vmul.f32 %v2903, %v1024
      %v2949 = vmul.f32 %v2907, %v1026
      %v2950 = vmul.f32 %v2911, %v1028
      %v2951 = vmul.f32 %v2915, %v1030
      %v2952 = vmul.f32 %v2919, %v1032
      %2985 = vrot.lane.b32.xlu0 %v2921, 64
      %v2986 = vpop.permute.xlu0 %2985
      %2987 = vrot.lane.b32.xlu0 %v2922, 64
      %v2988 = vpop.permute.xlu0 %2987
      %2989 = vrot.lane.b32.xlu0 %v2923, 64
      %v2990 = vpop.permute.xlu0 %2989
      %2991 = vrot.lane.b32.xlu0 %v2924, 64
      %v2992 = vpop.permute.xlu0 %2991
      %2993 = vrot.lane.b32.xlu0 %v2925, 64
      %v2994 = vpop.permute.xlu0 %2993
      %2995 = vrot.lane.b32.xlu0 %v2926, 64
      %v2996 = vpop.permute.xlu0 %2995
      %2997 = vrot.lane.b32.xlu0 %v2927, 64
      %v2998 = vpop.permute.xlu0 %2997
      %2999 = vrot.lane.b32.xlu0 %v2928, 64
      %v3000 = vpop.permute.xlu0 %2999
      %3001 = vrot.lane.b32.xlu0 %v2929, 64
      %v3002 = vpop.permute.xlu0 %3001
      %3003 = vrot.lane.b32.xlu0 %v2930, 64
      %v3004 = vpop.permute.xlu0 %3003
      %3005 = vrot.lane.b32.xlu0 %v2931, 64
      %v3006 = vpop.permute.xlu0 %3005
      %3007 = vrot.lane.b32.xlu0 %v2932, 64
      %v3008 = vpop.permute.xlu0 %3007
      %3009 = vrot.lane.b32.xlu0 %v2933, 64
      %v3010 = vpop.permute.xlu0 %3009
      %3011 = vrot.lane.b32.xlu0 %v2934, 64
      %v3012 = vpop.permute.xlu0 %3011
      %3013 = vrot.lane.b32.xlu0 %v2935, 64
      %v3014 = vpop.permute.xlu0 %3013
      %3015 = vrot.lane.b32.xlu0 %v2936, 64
      %v3016 = vpop.permute.xlu0 %3015
      %3017 = vrot.lane.b32.xlu0 %v2937, 64
      %v3018 = vpop.permute.xlu0 %3017
      %3019 = vrot.lane.b32.xlu0 %v2938, 64
      %v3020 = vpop.permute.xlu0 %3019
      %3021 = vrot.lane.b32.xlu0 %v2939, 64
      %v3022 = vpop.permute.xlu0 %3021
      %3023 = vrot.lane.b32.xlu0 %v2940, 64
      %v3024 = vpop.permute.xlu0 %3023
      %3025 = vrot.lane.b32.xlu0 %v2941, 64
      %v3026 = vpop.permute.xlu0 %3025
      %3027 = vrot.lane.b32.xlu0 %v2942, 64
      %v3028 = vpop.permute.xlu0 %3027
      %3029 = vrot.lane.b32.xlu0 %v2943, 64
      %v3030 = vpop.permute.xlu0 %3029
      %3031 = vrot.lane.b32.xlu0 %v2944, 64
      %v3032 = vpop.permute.xlu0 %3031
      %3033 = vrot.lane.b32.xlu0 %v2945, 64
      %v3034 = vpop.permute.xlu0 %3033
      %3035 = vrot.lane.b32.xlu0 %v2946, 64
      %v3036 = vpop.permute.xlu0 %3035
      %3037 = vrot.lane.b32.xlu0 %v2947, 64
      %v3038 = vpop.permute.xlu0 %3037
      %3039 = vrot.lane.b32.xlu0 %v2948, 64
      %v3040 = vpop.permute.xlu0 %3039
      %3041 = vrot.lane.b32.xlu0 %v2949, 64
      %v3042 = vpop.permute.xlu0 %3041
      %3043 = vrot.lane.b32.xlu0 %v2950, 64
      %v3044 = vpop.permute.xlu0 %3043
      %3045 = vrot.lane.b32.xlu0 %v2951, 64
      %v3046 = vpop.permute.xlu0 %3045
      %3047 = vrot.lane.b32.xlu0 %v2952, 64
      %v3048 = vpop.permute.xlu0 %3047
      %v3081 = vadd.f32 %v2761, %v2986
      %v3082 = vadd.f32 %v2762, %v2988
      %v3083 = vadd.f32 %v2763, %v2990
      %v3084 = vadd.f32 %v2764, %v2992
      %v3085 = vadd.f32 %v2765, %v2994
      %v3086 = vadd.f32 %v2766, %v2996
      %v3087 = vadd.f32 %v2767, %v2998
      %v3088 = vadd.f32 %v2768, %v3000
      %v3089 = vadd.f32 %v2769, %v3002
      %v3090 = vadd.f32 %v2770, %v3004
      %v3091 = vadd.f32 %v2771, %v3006
      %v3092 = vadd.f32 %v2772, %v3008
      %v3093 = vadd.f32 %v2773, %v3010
      %v3094 = vadd.f32 %v2774, %v3012
      %v3095 = vadd.f32 %v2775, %v3014
      %v3096 = vadd.f32 %v2776, %v3016
      %v3097 = vadd.f32 %v2777, %v3018
      %v3098 = vadd.f32 %v2778, %v3020
      %v3099 = vadd.f32 %v2779, %v3022
      %v3100 = vadd.f32 %v2780, %v3024
      %v3101 = vadd.f32 %v2781, %v3026
      %v3102 = vadd.f32 %v2782, %v3028
      %v3103 = vadd.f32 %v2783, %v3030
      %v3104 = vadd.f32 %v2784, %v3032
      %v3105 = vadd.f32 %v2785, %v3034
      %v3106 = vadd.f32 %v2786, %v3036
      %v3107 = vadd.f32 %v2787, %v3038
      %v3108 = vadd.f32 %v2788, %v3040
      %v3109 = vadd.f32 %v2789, %v3042
      %v3110 = vadd.f32 %v2790, %v3044
      %v3111 = vadd.f32 %v2791, %v3046
      %v3112 = vadd.f32 %v2792, %v3048
      %3113 = vset.pattern.permute.xlu0 7
      %3114 = vperm.xlu0 %3113, %v1065
      %v3115 = vpop.permute.xlu0 %3114
      %3117 = vset.pattern.permute.xlu0 7
      %3118 = vperm.xlu0 %3117, %v1066
      %v3119 = vpop.permute.xlu0 %3118
      %3121 = vset.pattern.permute.xlu0 7
      %3122 = vperm.xlu0 %3121, %v1067
      %v3123 = vpop.permute.xlu0 %3122
      %3125 = vset.pattern.permute.xlu0 7
      %3126 = vperm.xlu0 %3125, %v1068
      %v3127 = vpop.permute.xlu0 %3126
      %3129 = vset.pattern.permute.xlu0 7
      %3130 = vperm.xlu0 %3129, %v1069
      %v3131 = vpop.permute.xlu0 %3130
      %3133 = vset.pattern.permute.xlu0 7
      %3134 = vperm.xlu0 %3133, %v1070
      %v3135 = vpop.permute.xlu0 %3134
      %3137 = vset.pattern.permute.xlu0 7
      %3138 = vperm.xlu0 %3137, %v1071
      %v3139 = vpop.permute.xlu0 %3138
      %3141 = vset.pattern.permute.xlu0 7
      %3142 = vperm.xlu0 %3141, %v1072
      %v3143 = vpop.permute.xlu0 %3142
      %3145 = vset.pattern.permute.xlu0 7
      %3146 = vperm.xlu0 %3145, %v1073
      %v3147 = vpop.permute.xlu0 %3146
      %3149 = vset.pattern.permute.xlu0 7
      %3150 = vperm.xlu0 %3149, %v1074
      %v3151 = vpop.permute.xlu0 %3150
      %3153 = vset.pattern.permute.xlu0 7
      %3154 = vperm.xlu0 %3153, %v1075
      %v3155 = vpop.permute.xlu0 %3154
      %3157 = vset.pattern.permute.xlu0 7
      %3158 = vperm.xlu0 %3157, %v1076
      %v3159 = vpop.permute.xlu0 %3158
      %3161 = vset.pattern.permute.xlu0 7
      %3162 = vperm.xlu0 %3161, %v1077
      %v3163 = vpop.permute.xlu0 %3162
      %3165 = vset.pattern.permute.xlu0 7
      %3166 = vperm.xlu0 %3165, %v1078
      %v3167 = vpop.permute.xlu0 %3166
      %3169 = vset.pattern.permute.xlu0 7
      %3170 = vperm.xlu0 %3169, %v1079
      %v3171 = vpop.permute.xlu0 %3170
      %3173 = vset.pattern.permute.xlu0 7
      %3174 = vperm.xlu0 %3173, %v1080
      %v3175 = vpop.permute.xlu0 %3174
      %3177 = vset.pattern.permute.xlu0 7
      %3178 = vperm.xlu0 %3177, %v1081
      %v3179 = vpop.permute.xlu0 %3178
      %3181 = vset.pattern.permute.xlu0 7
      %3182 = vperm.xlu0 %3181, %v1082
      %v3183 = vpop.permute.xlu0 %3182
      %3185 = vset.pattern.permute.xlu0 7
      %3186 = vperm.xlu0 %3185, %v1083
      %v3187 = vpop.permute.xlu0 %3186
      %3189 = vset.pattern.permute.xlu0 7
      %3190 = vperm.xlu0 %3189, %v1084
      %v3191 = vpop.permute.xlu0 %3190
      %3193 = vset.pattern.permute.xlu0 7
      %3194 = vperm.xlu0 %3193, %v1085
      %v3195 = vpop.permute.xlu0 %3194
      %3197 = vset.pattern.permute.xlu0 7
      %3198 = vperm.xlu0 %3197, %v1086
      %v3199 = vpop.permute.xlu0 %3198
      %3201 = vset.pattern.permute.xlu0 7
      %3202 = vperm.xlu0 %3201, %v1087
      %v3203 = vpop.permute.xlu0 %3202
      %3205 = vset.pattern.permute.xlu0 7
      %3206 = vperm.xlu0 %3205, %v1088
      %v3207 = vpop.permute.xlu0 %3206
      %3209 = vset.pattern.permute.xlu0 7
      %3210 = vperm.xlu0 %3209, %v1089
      %v3211 = vpop.permute.xlu0 %3210
      %3213 = vset.pattern.permute.xlu0 7
      %3214 = vperm.xlu0 %3213, %v1090
      %v3215 = vpop.permute.xlu0 %3214
      %3217 = vset.pattern.permute.xlu0 7
      %3218 = vperm.xlu0 %3217, %v1091
      %v3219 = vpop.permute.xlu0 %3218
      %3221 = vset.pattern.permute.xlu0 7
      %3222 = vperm.xlu0 %3221, %v1092
      %v3223 = vpop.permute.xlu0 %3222
      %3225 = vset.pattern.permute.xlu0 7
      %3226 = vperm.xlu0 %3225, %v1093
      %v3227 = vpop.permute.xlu0 %3226
      %3229 = vset.pattern.permute.xlu0 7
      %3230 = vperm.xlu0 %3229, %v1094
      %v3231 = vpop.permute.xlu0 %3230
      %3233 = vset.pattern.permute.xlu0 7
      %3234 = vperm.xlu0 %3233, %v1095
      %v3235 = vpop.permute.xlu0 %3234
      %3237 = vset.pattern.permute.xlu0 7
      %3238 = vperm.xlu0 %3237, %v1096
      %v3239 = vpop.permute.xlu0 %3238
      %v3241 = vmul.f32 %v3115, %v970
      %v3242 = vmul.f32 %v3119, %v972
      %v3243 = vmul.f32 %v3123, %v974
      %v3244 = vmul.f32 %v3127, %v976
      %v3245 = vmul.f32 %v3131, %v978
      %v3246 = vmul.f32 %v3135, %v980
      %v3247 = vmul.f32 %v3139, %v982
      %v3248 = vmul.f32 %v3143, %v984
      %v3249 = vmul.f32 %v3147, %v986
      %v3250 = vmul.f32 %v3151, %v988
      %v3251 = vmul.f32 %v3155, %v990
      %v3252 = vmul.f32 %v3159, %v992
      %v3253 = vmul.f32 %v3163, %v994
      %v3254 = vmul.f32 %v3167, %v996
      %v3255 = vmul.f32 %v3171, %v998
      %v3256 = vmul.f32 %v3175, %v1000
      %v3257 = vmul.f32 %v3179, %v1002
      %v3258 = vmul.f32 %v3183, %v1004
      %v3259 = vmul.f32 %v3187, %v1006
      %v3260 = vmul.f32 %v3191, %v1008
      %v3261 = vmul.f32 %v3195, %v1010
      %v3262 = vmul.f32 %v3199, %v1012
      %v3263 = vmul.f32 %v3203, %v1014
      %v3264 = vmul.f32 %v3207, %v1016
      %v3265 = vmul.f32 %v3211, %v1018
      %v3266 = vmul.f32 %v3215, %v1020
      %v3267 = vmul.f32 %v3219, %v1022
      %v3268 = vmul.f32 %v3223, %v1024
      %v3269 = vmul.f32 %v3227, %v1026
      %v3270 = vmul.f32 %v3231, %v1028
      %v3271 = vmul.f32 %v3235, %v1030
      %v3272 = vmul.f32 %v3239, %v1032
      %3305 = vrot.lane.b32.xlu0 %v3241, 32
      %v3306 = vpop.permute.xlu0 %3305
      %3307 = vrot.lane.b32.xlu0 %v3242, 32
      %v3308 = vpop.permute.xlu0 %3307
      %3309 = vrot.lane.b32.xlu0 %v3243, 32
      %v3310 = vpop.permute.xlu0 %3309
      %3311 = vrot.lane.b32.xlu0 %v3244, 32
      %v3312 = vpop.permute.xlu0 %3311
      %3313 = vrot.lane.b32.xlu0 %v3245, 32
      %v3314 = vpop.permute.xlu0 %3313
      %3315 = vrot.lane.b32.xlu0 %v3246, 32
      %v3316 = vpop.permute.xlu0 %3315
      %3317 = vrot.lane.b32.xlu0 %v3247, 32
      %v3318 = vpop.permute.xlu0 %3317
      %3319 = vrot.lane.b32.xlu0 %v3248, 32
      %v3320 = vpop.permute.xlu0 %3319
      %3321 = vrot.lane.b32.xlu0 %v3249, 32
      %v3322 = vpop.permute.xlu0 %3321
      %3323 = vrot.lane.b32.xlu0 %v3250, 32
      %v3324 = vpop.permute.xlu0 %3323
      %3325 = vrot.lane.b32.xlu0 %v3251, 32
      %v3326 = vpop.permute.xlu0 %3325
      %3327 = vrot.lane.b32.xlu0 %v3252, 32
      %v3328 = vpop.permute.xlu0 %3327
      %3329 = vrot.lane.b32.xlu0 %v3253, 32
      %v3330 = vpop.permute.xlu0 %3329
      %3331 = vrot.lane.b32.xlu0 %v3254, 32
      %v3332 = vpop.permute.xlu0 %3331
      %3333 = vrot.lane.b32.xlu0 %v3255, 32
      %v3334 = vpop.permute.xlu0 %3333
      %3335 = vrot.lane.b32.xlu0 %v3256, 32
      %v3336 = vpop.permute.xlu0 %3335
      %3337 = vrot.lane.b32.xlu0 %v3257, 32
      %v3338 = vpop.permute.xlu0 %3337
      %3339 = vrot.lane.b32.xlu0 %v3258, 32
      %v3340 = vpop.permute.xlu0 %3339
      %3341 = vrot.lane.b32.xlu0 %v3259, 32
      %v3342 = vpop.permute.xlu0 %3341
      %3343 = vrot.lane.b32.xlu0 %v3260, 32
      %v3344 = vpop.permute.xlu0 %3343
      %3345 = vrot.lane.b32.xlu0 %v3261, 32
      %v3346 = vpop.permute.xlu0 %3345
      %3347 = vrot.lane.b32.xlu0 %v3262, 32
      %v3348 = vpop.permute.xlu0 %3347
      %3349 = vrot.lane.b32.xlu0 %v3263, 32
      %v3350 = vpop.permute.xlu0 %3349
      %3351 = vrot.lane.b32.xlu0 %v3264, 32
      %v3352 = vpop.permute.xlu0 %3351
      %3353 = vrot.lane.b32.xlu0 %v3265, 32
      %v3354 = vpop.permute.xlu0 %3353
      %3355 = vrot.lane.b32.xlu0 %v3266, 32
      %v3356 = vpop.permute.xlu0 %3355
      %3357 = vrot.lane.b32.xlu0 %v3267, 32
      %v3358 = vpop.permute.xlu0 %3357
      %3359 = vrot.lane.b32.xlu0 %v3268, 32
      %v3360 = vpop.permute.xlu0 %3359
      %3361 = vrot.lane.b32.xlu0 %v3269, 32
      %v3362 = vpop.permute.xlu0 %3361
      %3363 = vrot.lane.b32.xlu0 %v3270, 32
      %v3364 = vpop.permute.xlu0 %3363
      %3365 = vrot.lane.b32.xlu0 %v3271, 32
      %v3366 = vpop.permute.xlu0 %3365
      %3367 = vrot.lane.b32.xlu0 %v3272, 32
      %v3368 = vpop.permute.xlu0 %3367
      %v3401 = vadd.f32 %v3081, %v3306
      %v3402 = vadd.f32 %v3082, %v3308
      %v3403 = vadd.f32 %v3083, %v3310
      %v3404 = vadd.f32 %v3084, %v3312
      %v3405 = vadd.f32 %v3085, %v3314
      %v3406 = vadd.f32 %v3086, %v3316
      %v3407 = vadd.f32 %v3087, %v3318
      %v3408 = vadd.f32 %v3088, %v3320
      %v3409 = vadd.f32 %v3089, %v3322
      %v3410 = vadd.f32 %v3090, %v3324
      %v3411 = vadd.f32 %v3091, %v3326
      %v3412 = vadd.f32 %v3092, %v3328
      %v3413 = vadd.f32 %v3093, %v3330
      %v3414 = vadd.f32 %v3094, %v3332
      %v3415 = vadd.f32 %v3095, %v3334
      %v3416 = vadd.f32 %v3096, %v3336
      %v3417 = vadd.f32 %v3097, %v3338
      %v3418 = vadd.f32 %v3098, %v3340
      %v3419 = vadd.f32 %v3099, %v3342
      %v3420 = vadd.f32 %v3100, %v3344
      %v3421 = vadd.f32 %v3101, %v3346
      %v3422 = vadd.f32 %v3102, %v3348
      %v3423 = vadd.f32 %v3103, %v3350
      %v3424 = vadd.f32 %v3104, %v3352
      %v3425 = vadd.f32 %v3105, %v3354
      %v3426 = vadd.f32 %v3106, %v3356
      %v3427 = vadd.f32 %v3107, %v3358
      %v3428 = vadd.f32 %v3108, %v3360
      %v3429 = vadd.f32 %v3109, %v3362
      %v3430 = vadd.f32 %v3110, %v3364
      %v3431 = vadd.f32 %v3111, %v3366
      %v3432 = vadd.f32 %v3112, %v3368
      %v3433 = vmax.f32 %v3401, 0.0
      %v3434 = vmax.f32 %v3402, 0.0
      %v3435 = vmax.f32 %v3403, 0.0
      %v3436 = vmax.f32 %v3404, 0.0
      %v3437 = vmax.f32 %v3405, 0.0
      %v3438 = vmax.f32 %v3406, 0.0
      %v3439 = vmax.f32 %v3407, 0.0
      %v3440 = vmax.f32 %v3408, 0.0
      %v3441 = vmax.f32 %v3409, 0.0
      %v3442 = vmax.f32 %v3410, 0.0
      %v3443 = vmax.f32 %v3411, 0.0
      %v3444 = vmax.f32 %v3412, 0.0
      %v3445 = vmax.f32 %v3413, 0.0
      %v3446 = vmax.f32 %v3414, 0.0
      %v3447 = vmax.f32 %v3415, 0.0
      %v3448 = vmax.f32 %v3416, 0.0
      %v3449 = vmax.f32 %v3417, 0.0
      %v3450 = vmax.f32 %v3418, 0.0
      %v3451 = vmax.f32 %v3419, 0.0
      %v3452 = vmax.f32 %v3420, 0.0
      %v3453 = vmax.f32 %v3421, 0.0
      %v3454 = vmax.f32 %v3422, 0.0
      %v3455 = vmax.f32 %v3423, 0.0
      %v3456 = vmax.f32 %v3424, 0.0
      %v3457 = vmax.f32 %v3425, 0.0
      %v3458 = vmax.f32 %v3426, 0.0
      %v3459 = vmax.f32 %v3427, 0.0
      %v3460 = vmax.f32 %v3428, 0.0
      %v3461 = vmax.f32 %v3429, 0.0
      %v3462 = vmax.f32 %v3430, 0.0
      %v3463 = vmax.f32 %v3431, 0.0
      %v3464 = vmax.f32 %v3432, 0.0
      %v3465 = vmul.f32 %v3433, %v1033
      %v3466 = vmul.f32 %v3434, %v1034
      %v3467 = vmul.f32 %v3435, %v1035
      %v3468 = vmul.f32 %v3436, %v1036
      %v3469 = vmul.f32 %v3437, %v1037
      %v3470 = vmul.f32 %v3438, %v1038
      %v3471 = vmul.f32 %v3439, %v1039
      %v3472 = vmul.f32 %v3440, %v1040
      %v3473 = vmul.f32 %v3441, %v1041
      %v3474 = vmul.f32 %v3442, %v1042
      %v3475 = vmul.f32 %v3443, %v1043
      %v3476 = vmul.f32 %v3444, %v1044
      %v3477 = vmul.f32 %v3445, %v1045
      %v3478 = vmul.f32 %v3446, %v1046
      %v3479 = vmul.f32 %v3447, %v1047
      %v3480 = vmul.f32 %v3448, %v1048
      %v3481 = vmul.f32 %v3449, %v1049
      %v3482 = vmul.f32 %v3450, %v1050
      %v3483 = vmul.f32 %v3451, %v1051
      %v3484 = vmul.f32 %v3452, %v1052
      %v3485 = vmul.f32 %v3453, %v1053
      %v3486 = vmul.f32 %v3454, %v1054
      %v3487 = vmul.f32 %v3455, %v1055
      %v3488 = vmul.f32 %v3456, %v1056
      %v3489 = vmul.f32 %v3457, %v1057
      %v3490 = vmul.f32 %v3458, %v1058
      %v3491 = vmul.f32 %v3459, %v1059
      %v3492 = vmul.f32 %v3460, %v1060
      %v3493 = vmul.f32 %v3461, %v1061
      %v3494 = vmul.f32 %v3462, %v1062
      %v3495 = vmul.f32 %v3463, %v1063
      %v3496 = vmul.f32 %v3464, %v1064
      %vm3497 = vcmask 261120
      %v3498 = vsel %vm3497, %v3465, 0.0
      %3499 = vadd.xlane.f32.xlu0 %v3498
      %v3500 = vpop.xlane.xlu0 %3499
      %v3501 = vsel %vm3497, %v3466, 0.0
      %3502 = vadd.xlane.f32.xlu0 %v3501
      %v3503 = vpop.xlane.xlu0 %3502
      %v3504 = vsel %vm3497, %v3467, 0.0
      %3505 = vadd.xlane.f32.xlu0 %v3504
      %v3506 = vpop.xlane.xlu0 %3505
      %v3507 = vsel %vm3497, %v3468, 0.0
      %3508 = vadd.xlane.f32.xlu0 %v3507
      %v3509 = vpop.xlane.xlu0 %3508
      %v3510 = vsel %vm3497, %v3469, 0.0
      %3511 = vadd.xlane.f32.xlu0 %v3510
      %v3512 = vpop.xlane.xlu0 %3511
      %v3513 = vsel %vm3497, %v3470, 0.0
      %3514 = vadd.xlane.f32.xlu0 %v3513
      %v3515 = vpop.xlane.xlu0 %3514
      %v3516 = vsel %vm3497, %v3471, 0.0
      %3517 = vadd.xlane.f32.xlu0 %v3516
      %v3518 = vpop.xlane.xlu0 %3517
      %v3519 = vsel %vm3497, %v3472, 0.0
      %3520 = vadd.xlane.f32.xlu0 %v3519
      %v3521 = vpop.xlane.xlu0 %3520
      %v3522 = vsel %vm3497, %v3473, 0.0
      %3523 = vadd.xlane.f32.xlu0 %v3522
      %v3524 = vpop.xlane.xlu0 %3523
      %v3525 = vsel %vm3497, %v3474, 0.0
      %3526 = vadd.xlane.f32.xlu0 %v3525
      %v3527 = vpop.xlane.xlu0 %3526
      %v3528 = vsel %vm3497, %v3475, 0.0
      %3529 = vadd.xlane.f32.xlu0 %v3528
      %v3530 = vpop.xlane.xlu0 %3529
      %v3531 = vsel %vm3497, %v3476, 0.0
      %3532 = vadd.xlane.f32.xlu0 %v3531
      %v3533 = vpop.xlane.xlu0 %3532
      %v3534 = vsel %vm3497, %v3477, 0.0
      %3535 = vadd.xlane.f32.xlu0 %v3534
      %v3536 = vpop.xlane.xlu0 %3535
      %v3537 = vsel %vm3497, %v3478, 0.0
      %3538 = vadd.xlane.f32.xlu0 %v3537
      %v3539 = vpop.xlane.xlu0 %3538
      %v3540 = vsel %vm3497, %v3479, 0.0
      %3541 = vadd.xlane.f32.xlu0 %v3540
      %v3542 = vpop.xlane.xlu0 %3541
      %v3543 = vsel %vm3497, %v3480, 0.0
      %3544 = vadd.xlane.f32.xlu0 %v3543
      %v3545 = vpop.xlane.xlu0 %3544
      %v3546 = vsel %vm3497, %v3481, 0.0
      %3547 = vadd.xlane.f32.xlu0 %v3546
      %v3548 = vpop.xlane.xlu0 %3547
      %v3549 = vsel %vm3497, %v3482, 0.0
      %3550 = vadd.xlane.f32.xlu0 %v3549
      %v3551 = vpop.xlane.xlu0 %3550
      %v3552 = vsel %vm3497, %v3483, 0.0
      %3553 = vadd.xlane.f32.xlu0 %v3552
      %v3554 = vpop.xlane.xlu0 %3553
      %v3555 = vsel %vm3497, %v3484, 0.0
      %3556 = vadd.xlane.f32.xlu0 %v3555
      %v3557 = vpop.xlane.xlu0 %3556
      %v3558 = vsel %vm3497, %v3485, 0.0
      %3559 = vadd.xlane.f32.xlu0 %v3558
      %v3560 = vpop.xlane.xlu0 %3559
      %v3561 = vsel %vm3497, %v3486, 0.0
      %3562 = vadd.xlane.f32.xlu0 %v3561
      %v3563 = vpop.xlane.xlu0 %3562
      %v3564 = vsel %vm3497, %v3487, 0.0
      %3565 = vadd.xlane.f32.xlu0 %v3564
      %v3566 = vpop.xlane.xlu0 %3565
      %v3567 = vsel %vm3497, %v3488, 0.0
      %3568 = vadd.xlane.f32.xlu0 %v3567
      %v3569 = vpop.xlane.xlu0 %3568
      %v3570 = vsel %vm3497, %v3489, 0.0
      %3571 = vadd.xlane.f32.xlu0 %v3570
      %v3572 = vpop.xlane.xlu0 %3571
      %v3573 = vsel %vm3497, %v3490, 0.0
      %3574 = vadd.xlane.f32.xlu0 %v3573
      %v3575 = vpop.xlane.xlu0 %3574
      %v3576 = vsel %vm3497, %v3491, 0.0
      %3577 = vadd.xlane.f32.xlu0 %v3576
      %v3578 = vpop.xlane.xlu0 %3577
      %v3579 = vsel %vm3497, %v3492, 0.0
      %3580 = vadd.xlane.f32.xlu0 %v3579
      %v3581 = vpop.xlane.xlu0 %3580
      %v3582 = vsel %vm3497, %v3493, 0.0
      %3583 = vadd.xlane.f32.xlu0 %v3582
      %v3584 = vpop.xlane.xlu0 %3583
      %v3585 = vsel %vm3497, %v3494, 0.0
      %3586 = vadd.xlane.f32.xlu0 %v3585
      %v3587 = vpop.xlane.xlu0 %3586
      %v3588 = vsel %vm3497, %v3495, 0.0
      %3589 = vadd.xlane.f32.xlu0 %v3588
      %v3590 = vpop.xlane.xlu0 %3589
      %v3591 = vsel %vm3497, %v3496, 0.0
      %3592 = vadd.xlane.f32.xlu0 %v3591
      %v3593 = vpop.xlane.xlu0 %3592
      %v3594 = vadd.f32 %v3500, %v874
      %v3595 = vadd.f32 %v3503, %v877
      %v3596 = vadd.f32 %v3506, %v880
      %v3597 = vadd.f32 %v3509, %v883
      %v3598 = vadd.f32 %v3512, %v886
      %v3599 = vadd.f32 %v3515, %v889
      %v3600 = vadd.f32 %v3518, %v892
      %v3601 = vadd.f32 %v3521, %v895
      %v3602 = vadd.f32 %v3524, %v898
      %v3603 = vadd.f32 %v3527, %v901
      %v3604 = vadd.f32 %v3530, %v904
      %v3605 = vadd.f32 %v3533, %v907
      %v3606 = vadd.f32 %v3536, %v910
      %v3607 = vadd.f32 %v3539, %v913
      %v3608 = vadd.f32 %v3542, %v916
      %v3609 = vadd.f32 %v3545, %v919
      %v3610 = vadd.f32 %v3548, %v922
      %v3611 = vadd.f32 %v3551, %v925
      %v3612 = vadd.f32 %v3554, %v928
      %v3613 = vadd.f32 %v3557, %v931
      %v3614 = vadd.f32 %v3560, %v934
      %v3615 = vadd.f32 %v3563, %v937
      %v3616 = vadd.f32 %v3566, %v940
      %v3617 = vadd.f32 %v3569, %v943
      %v3618 = vadd.f32 %v3572, %v946
      %v3619 = vadd.f32 %v3575, %v949
      %v3620 = vadd.f32 %v3578, %v952
      %v3621 = vadd.f32 %v3581, %v955
      %v3622 = vadd.f32 %v3584, %v958
      %v3623 = vadd.f32 %v3587, %v961
      %v3624 = vadd.f32 %v3590, %v964
      %v3625 = vadd.f32 %v3593, %v967
      %vm3626 = vcmask 7168
      %3627 = vst.msk [vmem:[%s221] sm:$0xff] %vm3626, %v3594
      %3628 = vst.msk [vmem:[%s221 + $0x8] sm:$0xff] %vm3626, %v3595
      %3629 = vst.msk [vmem:[%s221 + $0x10] sm:$0xff] %vm3626, %v3596
      %3630 = vst.msk [vmem:[%s221 + $0x18] sm:$0xff] %vm3626, %v3597
      %3631 = vst.msk [vmem:[%s221 + $0x20] sm:$0xff] %vm3626, %v3598
      %3632 = vst.msk [vmem:[%s221 + $0x28] sm:$0xff] %vm3626, %v3599
      %3633 = vst.msk [vmem:[%s221 + $0x30] sm:$0xff] %vm3626, %v3600
      %3634 = vst.msk [vmem:[%s221 + $0x38] sm:$0xff] %vm3626, %v3601
      %3635 = vst.msk [vmem:[%s221 + $0x40] sm:$0xff] %vm3626, %v3602
      %3636 = vst.msk [vmem:[%s221 + $0x48] sm:$0xff] %vm3626, %v3603
      %3637 = vst.msk [vmem:[%s221 + $0x50] sm:$0xff] %vm3626, %v3604
      %3638 = vst.msk [vmem:[%s221 + $0x58] sm:$0xff] %vm3626, %v3605
      %3639 = vst.msk [vmem:[%s221 + $0x60] sm:$0xff] %vm3626, %v3606
      %3640 = vst.msk [vmem:[%s221 + $0x68] sm:$0xff] %vm3626, %v3607
      %3641 = vst.msk [vmem:[%s221 + $0x70] sm:$0xff] %vm3626, %v3608
      %3642 = vst.msk [vmem:[%s221 + $0x78] sm:$0xff] %vm3626, %v3609
      %3643 = vst.msk [vmem:[%s221 + $0x80] sm:$0xff] %vm3626, %v3610
      %3644 = vst.msk [vmem:[%s221 + $0x88] sm:$0xff] %vm3626, %v3611
      %3645 = vst.msk [vmem:[%s221 + $0x90] sm:$0xff] %vm3626, %v3612
      %3646 = vst.msk [vmem:[%s221 + $0x98] sm:$0xff] %vm3626, %v3613
      %3647 = vst.msk [vmem:[%s221 + $0xa0] sm:$0xff] %vm3626, %v3614
      %3648 = vst.msk [vmem:[%s221 + $0xa8] sm:$0xff] %vm3626, %v3615
      %3649 = vst.msk [vmem:[%s221 + $0xb0] sm:$0xff] %vm3626, %v3616
      %3650 = vst.msk [vmem:[%s221 + $0xb8] sm:$0xff] %vm3626, %v3617
      %3651 = vst.msk [vmem:[%s221 + $0xc0] sm:$0xff] %vm3626, %v3618
      %3652 = vst.msk [vmem:[%s221 + $0xc8] sm:$0xff] %vm3626, %v3619
      %3653 = vst.msk [vmem:[%s221 + $0xd0] sm:$0xff] %vm3626, %v3620
      %3654 = vst.msk [vmem:[%s221 + $0xd8] sm:$0xff] %vm3626, %v3621
      %3655 = vst.msk [vmem:[%s221 + $0xe0] sm:$0xff] %vm3626, %v3622
      %3656 = vst.msk [vmem:[%s221 + $0xe8] sm:$0xff] %vm3626, %v3623
      %3657 = vst.msk [vmem:[%s221 + $0xf0] sm:$0xff] %vm3626, %v3624
      %3658 = vst.msk [vmem:[%s221 + $0xf8] sm:$0xff] %vm3626, %v3625
      %s3659 = smul.u32 32, %s15
      %p3660 = scmp.lt.s32.totalorder %s3659, 63
      %s3661 = scalar_select %p3660, %s3659, 63
      %s3662 = smul.addr %s3661, 8
      %s3663 = scalar_lea.vmem %s4, %s3662
      // Predicated region
      $region37: #{mixer_forward.1} parent=35 // pred_check
        %p3664 = pneg %p127
      $region38: #{mixer_forward.1} parent=35 // pred_check_branch
        %3666 = sbr.rel (%p3664) target = $region40
      $region39: #{mixer_forward.1} parent=35 // pred_region
        %s3667 = smul.u32 32, %s15
      $region40: #{mixer_forward.1} parent=35 // pred_fallthru
        _
    $region36: #{mixer_forward.1} parent=5 // pred_fallthru
      _
    %p3668 = scmp.le.s32.totalorder 2, %s10
    // Predicated region
    $region41: #{mixer_forward.1} parent=5 // pred_check
      %p3669 = pneg %p3668
    $region42: #{mixer_forward.1} parent=5 // pred_check_branch
      %3671 = sbr.rel (%p3669) target = $region44
    $region43: #{mixer_forward.1} parent=5 // pred_region
      %s3672 = ssub.s32 %s10, 2
      // Predicated region
      $region45: #{mixer_forward.1} parent=43 // pred_check
        %p3673 = pneg %p133
      $region46: #{mixer_forward.1} parent=43 // pred_check_branch
        %3675 = sbr.rel (%p3673) target = $region48
      $region47: #{mixer_forward.1} parent=43 // pred_region
        %s3676 = smul.u32 32, %s16
        %p3677 = scmp.lt.s32.totalorder %s3676, 63
        %s3678 = scalar_select %p3677, %s3676, 63
        %s3679 = smul.addr %s3678, 8
        %s3680 = scalar_lea.vmem %s4, %s3679
      $region48: #{mixer_forward.1} parent=43 // pred_fallthru
        _
    $region44: #{mixer_forward.1} parent=5 // pred_fallthru
      _
  $region6: #{mixer_forward.1} parent=0 // loop_footer
    %s14 = sadd.s32 1, %s10
  $region7: #{mixer_forward.1} parent=0 // loop_footer_branch
    %9 = sbr.rel target = $region3
  $region8: #{mixer_forward.1} parent=0 // loop_exit
    _

</llo_original>
